<compile_context>
chip_gen: v7x
topology: tpu7x:2x2x1
jax: 0.10.0
libtpu: 0.0.40
codegen_flags: <defaults>
</compile_context>

<pallas_src>
import functools

import jax
import jax.numpy as jnp
from jax.experimental import pallas as pl
from jax.experimental.pallas import tpu as pltpu


# ----------------------------------------------------------------------------
# Pallas kernel: one grid step = G images folded into the lane axis, (C, G*HW).
# ----------------------------------------------------------------------------
def muti_aff_kernel(x0_ref, x1_ref, wc_ref, bc_ref, w1x0_ref, w1x1_ref, b1_ref,
                    w2a_ref, w2c_ref, pcat_ref, pmask_ref, ucat_ref, b2s_ref,
                    out_ref, *, n_full, use_global):
    f32 = jnp.float32

    def silu(v):
        return v * jax.nn.sigmoid(v)

    x0 = x0_ref[0]                         # (Chead, G*HW)
    x1 = x1_ref[0]                         # (Cin,  G*HW)

    # Compression conv (BN folded).  Only needed for the epilogue / batch==1
    # quirk; independent of the fused first-layer matmuls below.
    res = jnp.dot(wc_ref[...], x1, preferred_element_type=f32) + bc_ref[...]

    # Fused first bottleneck layer of ALL branches, compression folded in:
    #   W1 @ (x0 + Wc@x1 + bc) + b1 == W1@x0 + (W1@Wc)@x1 + (W1@bc + b1)
    # Both matmuls are independent of `res` (shorter critical path).
    h_all = (jnp.dot(w1x0_ref[...], x0, preferred_element_type=f32)
             + jnp.dot(w1x1_ref[...], x1, preferred_element_type=f32)
             + b1_ref[...])                                     # (R1, G*HW)

    # Full-resolution branches: local attention (+ identity 16x16 context).
    acc = jnp.dot(w2a_ref[...], silu(h_all[:n_full]), preferred_element_type=f32)

    # All pooled branches (4x4 / 8x8 [/16x16] [/global]) in 3 fused matmuls:
    # pool -> mask -> SiLU -> 1x1 conv -> nearest upsample, block-diag per image.
    hp = jnp.dot(h_all[n_full:], pcat_ref[...], preferred_element_type=f32)
    hp = hp * pmask_ref[...]               # keep each branch's own pooling only
    cc = jnp.dot(w2c_ref[...], silu(hp), preferred_element_type=f32)
    acc = acc + jnp.dot(cc, ucat_ref[...], preferred_element_type=f32)

    if not use_global:                     # PyTorch batch==1 quirk: add xa itself
        acc = acc + (x0 + res)

    wei = jax.nn.sigmoid(acc + b2s_ref[...])
    # 2*x0*wei + 2*res*(1-wei) == 2*(res + wei*(x0 - res))
    out_ref[0] = (2.0 * (res + wei * (x0 - res))).astype(out_ref.dtype)


# ----------------------------------------------------------------------------
# Helpers
# ----------------------------------------------------------------------------
def pool_mats_T(H, W, oh, ow):
    """Transposed pool / nearest-upsample matrices for the (C, HW) layout.

    PT: (HW, oh*ow) with  h @ PT == adaptive average pool of h.
    UT: (oh*ow, HW) with  s @ UT == nearest-neighbour upsample of s.
    """
    assert H % oh == 0 and W % ow == 0
    kh, kw = H // oh, W // ow
    idx = jnp.arange(H * W)
    r, c = idx // W, idx % W
    blk = (r // kh) * ow + (c // kw)                                   # (HW,)
    onehot = (blk[:, None] == jnp.arange(oh * ow)[None, :]).astype(jnp.float32)
    return onehot / float(kh * kw), onehot.T


def block_diag(mat, g):
    """g-fold block-diagonal replication of `mat` (per-image pooling/upsample)."""
    r, c = mat.shape
    eye = jnp.eye(g, dtype=mat.dtype)
    return (eye[:, None, :, None] * mat[None, :, None, :]).reshape(g * r, g * c)


def make_params(key, cin, chead, inter):
    """Deterministic synthetic params with BN folded into 1x1 conv weights.

    Weights stored (C_out, C_in).  Branch order: local, ctx1, ctx2, ctx3, global.
    """
    keys = jax.random.split(key, 80)
    it = iter(range(80))

    def nrm(shape, scale=0.3):
        return scale * jax.random.normal(keys[next(it)], shape, jnp.float32)

    def bn(c):
        gamma = 1.0 + 0.1 * jax.random.normal(keys[next(it)], (c,), jnp.float32)
        beta = 0.1 * jax.random.normal(keys[next(it)], (c,), jnp.float32)
        mean = 0.1 * jax.random.normal(keys[next(it)], (c,), jnp.float32)
        var = jnp.abs(1.0 + 0.1 * jax.random.normal(keys[next(it)], (c,), jnp.float32))
        scale = gamma / jnp.sqrt(var + 1e-5)
        shift = beta - mean * scale
        return scale, shift

    # compression: Conv(cin -> chead, bias=False) + BN(chead)
    Wc_raw = nrm((chead, cin))
    s, sh = bn(chead)
    Wc = Wc_raw * s[:, None]
    bc = sh

    W1s, b1s, W2s, b2s = [], [], [], []
    for _ in range(5):
        W1_raw = nrm((inter, chead))
        bias1 = nrm((inter,), 0.1)
        s1, sh1 = bn(inter)
        W1s.append(W1_raw * s1[:, None])
        b1s.append(bias1 * s1 + sh1)

        W2_raw = nrm((chead, inter))
        bias2 = nrm((chead,), 0.1)
        s2, sh2 = bn(chead)
        W2s.append(W2_raw * s2[:, None])
        b2s.append(bias2 * s2 + sh2)

    return (Wc, bc, jnp.stack(W1s), jnp.stack(b1s), jnp.stack(W2s), jnp.stack(b2s))


# ----------------------------------------------------------------------------
# Wrapper (NCHW in / NCHW out)
# ----------------------------------------------------------------------------
def muti_aff_pallas(x0_nchw, x1_nchw, params, *, num_grid_blocks=None,
                    force_ctx3_pool=False):
    N, Chead, H, W = x0_nchw.shape
    Cin = x1_nchw.shape[1]
    HW = H * W
    Wc, bc, W1s, b1s, W2s, b2s = params       # order: local, ctx1, ctx2, ctx3, global
    inter = W1s.shape[1]

    use_global = (N != 1)                     # trace-time batch==1 specialization
    ctx3_identity = (H == 16 and W == 16) and not force_ctx3_pool

    if num_grid_blocks is None:
        # One grid step for small N (per-step overhead dominates on single-core
        # v5e/v6e); two "parallel" steps for larger even N so both v7x
        # TensorCores get a shard of the batch.
        num_grid_blocks = 2 if (N >= 4 and N % 2 == 0) else 1
    assert N % num_grid_blocks == 0
    G = N // num_grid_blocks
    GHW = G * HW

    hp_prec = jax.lax.Precision.HIGHEST

    # Pad `inter` to a multiple of 8 (f32 sublane tile) so per-branch row
    # blocks of the fused activations are tile aligned for any r.
    inter_p = -(-inter // 8) * 8
    pad = inter_p - inter
    if pad:
        W1s = jnp.pad(W1s, ((0, 0), (0, pad), (0, 0)))
        b1s = jnp.pad(b1s, ((0, 0), (0, pad)))
        W2s = jnp.pad(W2s, ((0, 0), (0, 0), (0, pad)))

    # Branch layout: full-resolution branches first, then all pooled branches.
    fullres = [0, 3] if ctx3_identity else [0]
    pool_specs = [((4, 4), 1), ((8, 8), 2)]
    if not ctx3_identity:
        pool_specs.append(((16, 16), 3))
    if use_global:
        pool_specs.append(((1, 1), 4))
    pooled = [b for _, b in pool_specs]
    order = fullres + pooled

    # Fused first layer (all branches) with the compression conv folded in.
    W1cat = jnp.concatenate([W1s[i] for i in order], axis=0)            # (R1, Chead)
    b1cat = jnp.concatenate([b1s[i] for i in order], axis=0)            # (R1,)
    W1Wc = jnp.dot(W1cat, Wc, precision=hp_prec)                        # (R1, Cin)
    b1p = (jnp.dot(W1cat, bc, precision=hp_prec) + b1cat).reshape(-1, 1)

    # Fused second layer of the full-resolution branches.
    W2a = jnp.concatenate([W2s[i] for i in fullres], axis=1)            # (Chead, n_full)
    n_full = inter_p * len(fullres)

    # Fused pooled branches: block-diagonal (per-image) pool / upsample matrices.
    p_blocks, u_blocks, k_sizes = [], [], []
    for (oh, ow), _ in pool_specs:
        PT, UT = pool_mats_T(H, W, oh, ow)
        p_blocks.append(block_diag(PT, G))
        u_blocks.append(block_diag(UT, G))
        k_sizes.append(G * oh * ow)
    Pcat = jnp.concatenate(p_blocks, axis=1)                            # (GHW, Kp)
    Ucat = jnp.concatenate(u_blocks, axis=0)                            # (Kp, GHW)
    Kp = Pcat.shape[1]

    n_pool_rows = inter_p * len(pooled)
    pmask = jnp.zeros((n_pool_rows, Kp), jnp.float32)
    col = 0
    for t, k in enumerate(k_sizes):
        pmask = pmask.at[t * inter_p:(t + 1) * inter_p, col:col + k].set(1.0)
        col += k
    W2cat = jnp.concatenate([W2s[i] for i in pooled], axis=1)           # (Chead, n_pool_rows)

    b2sum = b2s[0] + b2s[1] + b2s[2] + b2s[3]
    if use_global:
        b2sum = b2sum + b2s[4]
    b2sum = b2sum.reshape(Chead, 1)

    # Fold the batch into the lane axis: (num_blocks, C, G*HW), lane-dense.
    def fold(z, c):
        return (z.reshape(num_grid_blocks, G, c, HW)
                 .transpose(0, 2, 1, 3).reshape(num_grid_blocks, c, GHW))
    x0f = fold(x0_nchw, Chead)
    x1f = fold(x1_nchw, Cin)

    consts = [Wc, bc.reshape(Chead, 1), W1cat, W1Wc, b1p, W2a, W2cat,
              Pcat, pmask, Ucat, b2sum]

    def full_spec(a):
        n = a.ndim
        return pl.BlockSpec(tuple(a.shape), lambda b, _n=n: (0,) * _n)

    in_specs = ([pl.BlockSpec((1, Chead, GHW), lambda b: (b, 0, 0)),
                 pl.BlockSpec((1, Cin, GHW), lambda b: (b, 0, 0))]
                + [full_spec(a) for a in consts])

    kernel = functools.partial(muti_aff_kernel, n_full=n_full, use_global=use_global)

    # Kernel args in the order muti_aff_kernel expects:
    # x0, x1, wc, bc, w1x0, w1x1, b1, w2a, w2c, pcat, pmask, ucat, b2s
    inputs = [x0f, x1f, Wc, bc.reshape(Chead, 1), W1cat, W1Wc, b1p,
              W2a, W2cat, Pcat, pmask, Ucat, b2sum]

    # Rough cost hints for the XLA scheduler.
    R1 = W1cat.shape[0]
    mm = lambda m, k, n: 2 * m * k * n
    flops = num_grid_blocks * (
        mm(Chead, Cin, GHW) + mm(R1, Chead, GHW) + mm(R1, Cin, GHW)
        + mm(Chead, n_full, GHW) + mm(n_pool_rows, GHW, Kp)
        + mm(Chead, n_pool_rows, Kp) + mm(Chead, Kp, GHW) + 12 * Chead * GHW)
    transc = num_grid_blocks * (n_full * GHW + n_pool_rows * Kp + Chead * GHW)
    const_bytes = sum(int(a.size) * 4 for a in inputs[2:])
    bytes_accessed = N * 4 * HW * (2 * Chead + Cin) + const_bytes

    out = pl.pallas_call(
        kernel,
        out_shape=jax.ShapeDtypeStruct((num_grid_blocks, Chead, GHW), jnp.float32),
        grid=(num_grid_blocks,),
        in_specs=in_specs,
        out_specs=pl.BlockSpec((1, Chead, GHW), lambda b: (b, 0, 0)),
        compiler_params=pltpu.CompilerParams(
            dimension_semantics=("parallel",),
            vmem_limit_bytes=32 * 1024 * 1024),
        cost_estimate=pl.CostEstimate(flops=int(flops),
                                      transcendentals=int(transc),
                                      bytes_accessed=int(bytes_accessed)),
    )(*inputs)

    # Unfold lanes back to NCHW.
    out = (out.reshape(num_grid_blocks, Chead, G, HW)
              .transpose(0, 2, 1, 3).reshape(N, Chead, H, W))
    return out


# ----------------------------------------------------------------------------
# Pure-JAX reference (NCHW, same folded parameters) for correctness check
# ----------------------------------------------------------------------------
def muti_aff_reference(x0, x1, params):
    Wc, bc, W1s, b1s, W2s, b2s = params
    N, C, H, W = x0.shape
    hp = jax.lax.Precision.HIGHEST

    def conv1x1(z, Wm, b):
        return jnp.einsum('dc,nchw->ndhw', Wm, z, precision=hp) + b[None, :, None, None]

    def bottleneck(z, i):
        h = conv1x1(z, W1s[i], b1s[i])
        h = h * jax.nn.sigmoid(h)
        return conv1x1(h, W2s[i], b2s[i])

    def adaptive_pool(z, oh, ow):
        n, c, hh, ww = z.shape
        return z.reshape(n, c, oh, hh // oh, ow, ww // ow).mean(axis=(3, 5))

    def upnearest(z, HH, WW):
        n, c, oh, ow = z.shape
        return jnp.repeat(jnp.repeat(z, HH // oh, axis=2), WW // ow, axis=3)

    res = conv1x1(x1, Wc, bc)
    xa = x0 + res
    xl = bottleneck(xa, 0)
    c1 = upnearest(bottleneck(adaptive_pool(xa, 4, 4), 1), H, W)
    c2 = upnearest(bottleneck(adaptive_pool(xa, 8, 8), 2), H, W)
    c3 = upnearest(bottleneck(adaptive_pool(xa, 16, 16), 3), H, W)
    g = bottleneck(xa.mean(axis=(2, 3), keepdims=True), 4) if N != 1 else xa
    wei = jax.nn.sigmoid(xl + g + c1 + c2 + c3)
    return 2.0 * x0 * wei + 2.0 * res * (1.0 - wei)


# ----------------------------------------------------------------------------
if __name__ == "__main__":
    chMFACB, chHead, r = 8, 32, 4
    H = W = 16
    inter = chHead // r

    key = jax.random.PRNGKey(0)
    k0, k1, kp = jax.random.split(key, 3)
    params = make_params(kp, chMFACB, chHead, inter)

    def check(N, **kw):
        kk0, kk1 = jax.random.split(jax.random.fold_in(key, N), 2)
        x0 = jax.random.normal(kk0, (N, chHead, H, W), jnp.float32)   # x[0]
        x1 = jax.random.normal(kk1, (N, chMFACB, H, W), jnp.float32)  # x[1]
        out = jax.block_until_ready(muti_aff_pallas(x0, x1, params, **kw))
        ref = jax.block_until_ready(muti_aff_reference(x0, x1, params))
        err = float(jnp.max(jnp.abs(out - ref)))
        if err > 2e-2:
            raise AssertionError(f"mismatch vs reference (N={N}, {kw}): "
                                 f"max abs err = {err}")

    check(2)                            # batch folded into lanes, global branch
    check(1)                            # PyTorch batch==1 quirk path
    check(2, force_ctx3_pool=True)      # generic pooled-ctx3 code path

    print("KERNEL_OK")
</pallas_src>

<mosaic_0001>
module attributes {stable_mosaic.version = 11 : i64} {
  func.func @muti_aff_kernel(%arg0: i32, %arg1: memref<1x32x512xf32, #tpu.memory_space<vmem>>, %arg2: memref<1x8x512xf32, #tpu.memory_space<vmem>>, %arg3: memref<32x8xf32, #tpu.memory_space<vmem>>, %arg4: memref<32x1xf32, #tpu.memory_space<vmem>>, %arg5: memref<40x32xf32, #tpu.memory_space<vmem>>, %arg6: memref<40x8xf32, #tpu.memory_space<vmem>>, %arg7: memref<40x1xf32, #tpu.memory_space<vmem>>, %arg8: memref<32x16xf32, #tpu.memory_space<vmem>>, %arg9: memref<32x24xf32, #tpu.memory_space<vmem>>, %arg10: memref<512x162xf32, #tpu.memory_space<vmem>>, %arg11: memref<24x162xf32, #tpu.memory_space<vmem>>, %arg12: memref<162x512xf32, #tpu.memory_space<vmem>>, %arg13: memref<32x1xf32, #tpu.memory_space<vmem>>, %arg14: memref<1x32x512xf32, #tpu.memory_space<vmem>>) attributes {dimension_semantics = [#tpu.dimension_semantics<parallel>], iteration_bounds = array<i64: 1>, scalar_prefetch = 0 : i64, scratch_operands = 0 : i64, tpu.core_type = #tpu.core_type<tc>, window_params = [{transform_indices = @transform_0, window_bounds = array<i64: 1, 32, 512>}, {transform_indices = @transform_1, window_bounds = array<i64: 1, 8, 512>}, {pipeline_mode = #tpu.pipeline_mode<synchronous>, transform_indices = @transform_2, window_bounds = array<i64: 32, 8>}, {pipeline_mode = #tpu.pipeline_mode<synchronous>, transform_indices = @transform_3, window_bounds = array<i64: 32, 1>}, {pipeline_mode = #tpu.pipeline_mode<synchronous>, transform_indices = @transform_4, window_bounds = array<i64: 40, 32>}, {pipeline_mode = #tpu.pipeline_mode<synchronous>, transform_indices = @transform_5, window_bounds = array<i64: 40, 8>}, {pipeline_mode = #tpu.pipeline_mode<synchronous>, transform_indices = @transform_6, window_bounds = array<i64: 40, 1>}, {pipeline_mode = #tpu.pipeline_mode<synchronous>, transform_indices = @transform_7, window_bounds = array<i64: 32, 16>}, {pipeline_mode = #tpu.pipeline_mode<synchronous>, transform_indices = @transform_8, window_bounds = array<i64: 32, 24>}, {pipeline_mode = #tpu.pipeline_mode<synchronous>, transform_indices = @transform_9, window_bounds = array<i64: 512, 162>}, {pipeline_mode = #tpu.pipeline_mode<synchronous>, transform_indices = @transform_10, window_bounds = array<i64: 24, 162>}, {pipeline_mode = #tpu.pipeline_mode<synchronous>, transform_indices = @transform_11, window_bounds = array<i64: 162, 512>}, {pipeline_mode = #tpu.pipeline_mode<synchronous>, transform_indices = @transform_12, window_bounds = array<i64: 32, 1>}, {transform_indices = @transform_13, window_bounds = array<i64: 1, 32, 512>}]} {
    %c0 = arith.constant 0 : index
    %c0_0 = arith.constant 0 : index
    %c0_1 = arith.constant 0 : index
    %0 = vector.load %arg1[%c0, %c0_0, %c0_1] : memref<1x32x512xf32, #tpu.memory_space<vmem>>, vector<1x32x512xf32>
    %1 = vector.shape_cast %0 : vector<1x32x512xf32> to vector<32x512xf32>
    %c0_2 = arith.constant 0 : index
    %c0_3 = arith.constant 0 : index
    %c0_4 = arith.constant 0 : index
    %2 = vector.load %arg2[%c0_2, %c0_3, %c0_4] : memref<1x8x512xf32, #tpu.memory_space<vmem>>, vector<1x8x512xf32>
    %3 = vector.shape_cast %2 : vector<1x8x512xf32> to vector<8x512xf32>
    %c0_5 = arith.constant 0 : index
    %c0_6 = arith.constant 0 : index
    %4 = vector.load %arg3[%c0_5, %c0_6] : memref<32x8xf32, #tpu.memory_space<vmem>>, vector<32x8xf32>
    %cst = arith.constant dense<0.000000e+00> : vector<32x512xf32>
    %5 = tpu.matmul %4, %3, %cst {dimension_numbers = #tpu.dot_dimension_numbers<[1], [0], [0], [1], [0, 0, 1, 1], [], []>} : vector<32x8xf32>, vector<8x512xf32>, vector<32x512xf32> -> vector<32x512xf32>
    %c0_7 = arith.constant 0 : index
    %c0_8 = arith.constant 0 : index
    %6 = vector.load %arg4[%c0_7, %c0_8] : memref<32x1xf32, #tpu.memory_space<vmem>>, vector<32x1xf32>
    %7 = vector.broadcast %6 : vector<32x1xf32> to vector<32x512xf32>
    %8 = arith.addf %5, %7 : vector<32x512xf32>
    %c0_9 = arith.constant 0 : index
    %c0_10 = arith.constant 0 : index
    %9 = vector.load %arg5[%c0_9, %c0_10] : memref<40x32xf32, #tpu.memory_space<vmem>>, vector<40x32xf32>
    %cst_11 = arith.constant dense<0.000000e+00> : vector<40x512xf32>
    %10 = tpu.matmul %9, %1, %cst_11 {dimension_numbers = #tpu.dot_dimension_numbers<[1], [0], [0], [1], [0, 0, 1, 1], [], []>} : vector<40x32xf32>, vector<32x512xf32>, vector<40x512xf32> -> vector<40x512xf32>
    %c0_12 = arith.constant 0 : index
    %c0_13 = arith.constant 0 : index
    %11 = vector.load %arg6[%c0_12, %c0_13] : memref<40x8xf32, #tpu.memory_space<vmem>>, vector<40x8xf32>
    %cst_14 = arith.constant dense<0.000000e+00> : vector<40x512xf32>
    %12 = tpu.matmul %11, %3, %cst_14 {dimension_numbers = #tpu.dot_dimension_numbers<[1], [0], [0], [1], [0, 0, 1, 1], [], []>} : vector<40x8xf32>, vector<8x512xf32>, vector<40x512xf32> -> vector<40x512xf32>
    %13 = arith.addf %10, %12 : vector<40x512xf32>
    %c0_15 = arith.constant 0 : index
    %c0_16 = arith.constant 0 : index
    %14 = vector.load %arg7[%c0_15, %c0_16] : memref<40x1xf32, #tpu.memory_space<vmem>>, vector<40x1xf32>
    %15 = vector.broadcast %14 : vector<40x1xf32> to vector<40x512xf32>
    %16 = arith.addf %13, %15 : vector<40x512xf32>
    %c0_17 = arith.constant 0 : index
    %c0_18 = arith.constant 0 : index
    %17 = vector.load %arg8[%c0_17, %c0_18] : memref<32x16xf32, #tpu.memory_space<vmem>>, vector<32x16xf32>
    %18 = vector.extract_strided_slice %16 {offsets = [0, 0], sizes = [16, 512], strides = [1, 1]} : vector<40x512xf32> to vector<16x512xf32>
    %19 = arith.negf %18 : vector<16x512xf32>
    %20 = math.exp %19 : vector<16x512xf32>
    %cst_19 = arith.constant 1.000000e+00 : f32
    %21 = vector.broadcast %cst_19 : f32 to vector<16x512xf32>
    %22 = arith.addf %21, %20 : vector<16x512xf32>
    %23 = arith.divf %21, %22 : vector<16x512xf32>
    %24 = arith.mulf %18, %23 : vector<16x512xf32>
    %cst_20 = arith.constant dense<0.000000e+00> : vector<32x512xf32>
    %25 = tpu.matmul %17, %24, %cst_20 {dimension_numbers = #tpu.dot_dimension_numbers<[1], [0], [0], [1], [0, 0, 1, 1], [], []>} : vector<32x16xf32>, vector<16x512xf32>, vector<32x512xf32> -> vector<32x512xf32>
    %26 = vector.extract_strided_slice %16 {offsets = [16, 0], sizes = [24, 512], strides = [1, 1]} : vector<40x512xf32> to vector<24x512xf32>
    %c0_21 = arith.constant 0 : index
    %c0_22 = arith.constant 0 : index
    %27 = vector.load %arg10[%c0_21, %c0_22] : memref<512x162xf32, #tpu.memory_space<vmem>>, vector<512x162xf32>
    %cst_23 = arith.constant dense<0.000000e+00> : vector<24x162xf32>
    %28 = tpu.matmul %26, %27, %cst_23 {dimension_numbers = #tpu.dot_dimension_numbers<[1], [0], [0], [1], [0, 0, 1, 1], [], []>} : vector<24x512xf32>, vector<512x162xf32>, vector<24x162xf32> -> vector<24x162xf32>
    %c0_24 = arith.constant 0 : index
    %c0_25 = arith.constant 0 : index
    %29 = vector.load %arg11[%c0_24, %c0_25] : memref<24x162xf32, #tpu.memory_space<vmem>>, vector<24x162xf32>
    %30 = arith.mulf %28, %29 : vector<24x162xf32>
    %c0_26 = arith.constant 0 : index
    %c0_27 = arith.constant 0 : index
    %31 = vector.load %arg9[%c0_26, %c0_27] : memref<32x24xf32, #tpu.memory_space<vmem>>, vector<32x24xf32>
    %32 = arith.negf %30 : vector<24x162xf32>
    %33 = math.exp %32 : vector<24x162xf32>
    %cst_28 = arith.constant 1.000000e+00 : f32
    %34 = vector.broadcast %cst_28 : f32 to vector<24x162xf32>
    %35 = arith.addf %34, %33 : vector<24x162xf32>
    %36 = arith.divf %34, %35 : vector<24x162xf32>
    %37 = arith.mulf %30, %36 : vector<24x162xf32>
    %cst_29 = arith.constant dense<0.000000e+00> : vector<32x162xf32>
    %38 = tpu.matmul %31, %37, %cst_29 {dimension_numbers = #tpu.dot_dimension_numbers<[1], [0], [0], [1], [0, 0, 1, 1], [], []>} : vector<32x24xf32>, vector<24x162xf32>, vector<32x162xf32> -> vector<32x162xf32>
    %c0_30 = arith.constant 0 : index
    %c0_31 = arith.constant 0 : index
    %39 = vector.load %arg12[%c0_30, %c0_31] : memref<162x512xf32, #tpu.memory_space<vmem>>, vector<162x512xf32>
    %cst_32 = arith.constant dense<0.000000e+00> : vector<32x512xf32>
    %40 = tpu.matmul %38, %39, %cst_32 {dimension_numbers = #tpu.dot_dimension_numbers<[1], [0], [0], [1], [0, 0, 1, 1], [], []>} : vector<32x162xf32>, vector<162x512xf32>, vector<32x512xf32> -> vector<32x512xf32>
    %41 = arith.addf %25, %40 : vector<32x512xf32>
    %c0_33 = arith.constant 0 : index
    %c0_34 = arith.constant 0 : index
    %42 = vector.load %arg13[%c0_33, %c0_34] : memref<32x1xf32, #tpu.memory_space<vmem>>, vector<32x1xf32>
    %43 = vector.broadcast %42 : vector<32x1xf32> to vector<32x512xf32>
    %44 = arith.addf %41, %43 : vector<32x512xf32>
    %45 = arith.negf %44 : vector<32x512xf32>
    %46 = math.exp %45 : vector<32x512xf32>
    %cst_35 = arith.constant 1.000000e+00 : f32
    %47 = vector.broadcast %cst_35 : f32 to vector<32x512xf32>
    %48 = arith.addf %47, %46 : vector<32x512xf32>
    %49 = arith.divf %47, %48 : vector<32x512xf32>
    %50 = arith.subf %1, %8 : vector<32x512xf32>
    %51 = arith.mulf %49, %50 : vector<32x512xf32>
    %52 = arith.addf %8, %51 : vector<32x512xf32>
    %cst_36 = arith.constant 2.000000e+00 : f32
    %53 = vector.broadcast %cst_36 : f32 to vector<32x512xf32>
    %54 = arith.mulf %53, %52 : vector<32x512xf32>
    %c0_37 = arith.constant 0 : index
    %c0_38 = arith.constant 0 : index
    %c0_39 = arith.constant 0 : index
    %55 = vector.load %arg14[%c0_37, %c0_38, %c0_39] : memref<1x32x512xf32, #tpu.memory_space<vmem>>, vector<1x32x512xf32>
    %56 = vector.shape_cast %55 : vector<1x32x512xf32> to vector<32x512xf32>
    %57 = vector.shape_cast %54 : vector<32x512xf32> to vector<1x32x512xf32>
    tpu.vector_store %arg14[%c0_37, %c0_38, %c0_39], %57 {strides = array<i32>} : memref<1x32x512xf32, #tpu.memory_space<vmem>>, vector<1x32x512xf32>,
    return
  }
  func.func @transform_0(%arg0: i32) -> (i32, i32, i32) {
    %c0_i32 = arith.constant 0 : i32
    %c0_i32_0 = arith.constant 0 : i32
    %c0_i32_1 = arith.constant 0 : i32
    return %arg0, %c0_i32, %c0_i32_0 : i32, i32, i32
  }
  func.func @transform_1(%arg0: i32) -> (i32, i32, i32) {
    %c0_i32 = arith.constant 0 : i32
    %c0_i32_0 = arith.constant 0 : i32
    %c0_i32_1 = arith.constant 0 : i32
    return %arg0, %c0_i32, %c0_i32_0 : i32, i32, i32
  }
  func.func @transform_2(%arg0: i32) -> (i32, i32) {
    %c0_i32 = arith.constant 0 : i32
    %c0_i32_0 = arith.constant 0 : i32
    %c0_i32_1 = arith.constant 0 : i32
    return %c0_i32, %c0_i32_0 : i32, i32
  }
  func.func @transform_3(%arg0: i32) -> (i32, i32) {
    %c0_i32 = arith.constant 0 : i32
    %c0_i32_0 = arith.constant 0 : i32
    %c0_i32_1 = arith.constant 0 : i32
    return %c0_i32, %c0_i32_0 : i32, i32
  }
  func.func @transform_4(%arg0: i32) -> (i32, i32) {
    %c0_i32 = arith.constant 0 : i32
    %c0_i32_0 = arith.constant 0 : i32
    %c0_i32_1 = arith.constant 0 : i32
    return %c0_i32, %c0_i32_0 : i32, i32
  }
  func.func @transform_5(%arg0: i32) -> (i32, i32) {
    %c0_i32 = arith.constant 0 : i32
    %c0_i32_0 = arith.constant 0 : i32
    %c0_i32_1 = arith.constant 0 : i32
    return %c0_i32, %c0_i32_0 : i32, i32
  }
  func.func @transform_6(%arg0: i32) -> (i32, i32) {
    %c0_i32 = arith.constant 0 : i32
    %c0_i32_0 = arith.constant 0 : i32
    %c0_i32_1 = arith.constant 0 : i32
    return %c0_i32, %c0_i32_0 : i32, i32
  }
  func.func @transform_7(%arg0: i32) -> (i32, i32) {
    %c0_i32 = arith.constant 0 : i32
    %c0_i32_0 = arith.constant 0 : i32
    %c0_i32_1 = arith.constant 0 : i32
    return %c0_i32, %c0_i32_0 : i32, i32
  }
  func.func @transform_8(%arg0: i32) -> (i32, i32) {
    %c0_i32 = arith.constant 0 : i32
    %c0_i32_0 = arith.constant 0 : i32
    %c0_i32_1 = arith.constant 0 : i32
    return %c0_i32, %c0_i32_0 : i32, i32
  }
  func.func @transform_9(%arg0: i32) -> (i32, i32) {
    %c0_i32 = arith.constant 0 : i32
    %c0_i32_0 = arith.constant 0 : i32
    %c0_i32_1 = arith.constant 0 : i32
    return %c0_i32, %c0_i32_0 : i32, i32
  }
  func.func @transform_10(%arg0: i32) -> (i32, i32) {
    %c0_i32 = arith.constant 0 : i32
    %c0_i32_0 = arith.constant 0 : i32
    %c0_i32_1 = arith.constant 0 : i32
    return %c0_i32, %c0_i32_0 : i32, i32
  }
  func.func @transform_11(%arg0: i32) -> (i32, i32) {
    %c0_i32 = arith.constant 0 : i32
    %c0_i32_0 = arith.constant 0 : i32
    %c0_i32_1 = arith.constant 0 : i32
    return %c0_i32, %c0_i32_0 : i32, i32
  }
  func.func @transform_12(%arg0: i32) -> (i32, i32) {
    %c0_i32 = arith.constant 0 : i32
    %c0_i32_0 = arith.constant 0 : i32
    %c0_i32_1 = arith.constant 0 : i32
    return %c0_i32, %c0_i32_0 : i32, i32
  }
  func.func @transform_13(%arg0: i32) -> (i32, i32, i32) {
    %c0_i32 = arith.constant 0 : i32
    %c0_i32_0 = arith.constant 0 : i32
    %c0_i32_1 = arith.constant 0 : i32
    return %arg0, %c0_i32, %c0_i32_0 : i32, i32, i32
  }
}

</mosaic_0001>

<llo_original>
// kernel: tpu_custom_call.1
$region0: #{tpu_custom_call.1}
  #allocation0 [shape = 'u32[]', space=smem, size = 0x4, offset = 0x4, fixed_abs, tag = 'smem constant byte address 0x4 - core index']
  #allocation1 [shape = 'u32[144,128]{1,0:T(1,128)}', space=vmem, size = 0x12000, scoped, tag = 'internal scratch']
  %s0 = inlined_call_operand.vmem [shape: f32[1,32,512], index: 0, kind: input, shape index: {}]
  %s1 = inlined_call_operand.vmem [shape: f32[1,8,512], index: 1, kind: input, shape index: {}]
  %s2 = inlined_call_operand.vmem [shape: f32[32,8], index: 2, kind: input, shape index: {}]
  %s3 = inlined_call_operand.vmem [shape: f32[32,1], index: 3, kind: input, shape index: {}]
  %s4 = inlined_call_operand.vmem [shape: f32[40,32], index: 4, kind: input, shape index: {}]
  %s5 = inlined_call_operand.vmem [shape: f32[40,8], index: 5, kind: input, shape index: {}]
  %s6 = inlined_call_operand.vmem [shape: f32[40,1], index: 6, kind: input, shape index: {}]
  %s7 = inlined_call_operand.vmem [shape: f32[32,16], index: 7, kind: input, shape index: {}]
  %s8 = inlined_call_operand.vmem [shape: f32[32,24], index: 8, kind: input, shape index: {}]
  %s9 = inlined_call_operand.vmem [shape: f32[512,162], index: 9, kind: input, shape index: {}]
  %s10 = inlined_call_operand.vmem [shape: f32[24,162], index: 10, kind: input, shape index: {}]
  %s11 = inlined_call_operand.vmem [shape: f32[162,512], index: 11, kind: input, shape index: {}]
  %s12 = inlined_call_operand.vmem [shape: f32[32,1], index: 12, kind: input, shape index: {}]
  %s13 = inlined_call_operand.hbm [shape: f32[1,32,512], index: 13, kind: output, shape index: {}]
  %s14 = sld [smem:[#allocation0]]
  $region62: #{tpu_custom_call.1} parent=0
    _
  %s16 = ssub.s32 1, %s14
  %s17 = scalar_select 0, %s16, %s14
  $region1: #{tpu_custom_call.1} parent=0
    #allocation2 [shape = 'u8[65536]{0}', space=vmem, size = 0x10000, scoped, tag = 'output window, operand 0, single buffered']
    #allocation3 [shape = 's32[1]{0}', space=sflag, size = 0x4, scoped, tag = 'scoped memory for tpu_custom_call.1']
    %18 = vsyncpa [#allocation3], 0
    // Predicated region
    $region2: #{tpu_custom_call.1} parent=1 // pred_check
      _
    $region3: #{tpu_custom_call.1} parent=1 // pred_check_branch
      %20 = sbr.rel (0) target = $region5
    $region4: #{tpu_custom_call.1} parent=1 // pred_region
      _
    $region5: #{tpu_custom_call.1} parent=1 // pred_fallthru
      _
    // Predicated region
    $region6: #{tpu_custom_call.1} parent=1 // pred_check
      _
    $region7: #{tpu_custom_call.1} parent=1 // pred_check_branch
      %22 = sbr.rel (0) target = $region9
    $region8: #{tpu_custom_call.1} parent=1 // pred_region
      _
    $region9: #{tpu_custom_call.1} parent=1 // pred_fallthru
      _
    // Predicated region
    $region10: #{tpu_custom_call.1} parent=1 // pred_check
      _
    $region11: #{tpu_custom_call.1} parent=1 // pred_check_branch
      %24 = sbr.rel (0) target = $region13
    $region12: #{tpu_custom_call.1} parent=1 // pred_region
      _
    $region13: #{tpu_custom_call.1} parent=1 // pred_fallthru
      _
    // Predicated region
    $region14: #{tpu_custom_call.1} parent=1 // pred_check
      _
    $region15: #{tpu_custom_call.1} parent=1 // pred_check_branch
      %26 = sbr.rel (0) target = $region17
    $region16: #{tpu_custom_call.1} parent=1 // pred_region
      _
    $region17: #{tpu_custom_call.1} parent=1 // pred_fallthru
      _
    // Predicated region
    $region18: #{tpu_custom_call.1} parent=1 // pred_check
      _
    $region19: #{tpu_custom_call.1} parent=1 // pred_check_branch
      %28 = sbr.rel (0) target = $region21
    $region20: #{tpu_custom_call.1} parent=1 // pred_region
      _
    $region21: #{tpu_custom_call.1} parent=1 // pred_fallthru
      _
    // Predicated region
    $region22: #{tpu_custom_call.1} parent=1 // pred_check
      _
    $region23: #{tpu_custom_call.1} parent=1 // pred_check_branch
      %30 = sbr.rel (0) target = $region25
    $region24: #{tpu_custom_call.1} parent=1 // pred_region
      _
    $region25: #{tpu_custom_call.1} parent=1 // pred_fallthru
      _
    // Predicated region
    $region26: #{tpu_custom_call.1} parent=1 // pred_check
      _
    $region27: #{tpu_custom_call.1} parent=1 // pred_check_branch
      %32 = sbr.rel (0) target = $region29
    $region28: #{tpu_custom_call.1} parent=1 // pred_region
      _
    $region29: #{tpu_custom_call.1} parent=1 // pred_fallthru
      _
    // Predicated region
    $region30: #{tpu_custom_call.1} parent=1 // pred_check
      _
    $region31: #{tpu_custom_call.1} parent=1 // pred_check_branch
      %34 = sbr.rel (0) target = $region33
    $region32: #{tpu_custom_call.1} parent=1 // pred_region
      _
    $region33: #{tpu_custom_call.1} parent=1 // pred_fallthru
      _
    // Predicated region
    $region34: #{tpu_custom_call.1} parent=1 // pred_check
      _
    $region35: #{tpu_custom_call.1} parent=1 // pred_check_branch
      %36 = sbr.rel (0) target = $region37
    $region36: #{tpu_custom_call.1} parent=1 // pred_region
      _
    $region37: #{tpu_custom_call.1} parent=1 // pred_fallthru
      _
    // Predicated region
    $region38: #{tpu_custom_call.1} parent=1 // pred_check
      _
    $region39: #{tpu_custom_call.1} parent=1 // pred_check_branch
      %38 = sbr.rel (0) target = $region41
    $region40: #{tpu_custom_call.1} parent=1 // pred_region
      _
    $region41: #{tpu_custom_call.1} parent=1 // pred_fallthru
      _
    // Predicated region
    $region42: #{tpu_custom_call.1} parent=1 // pred_check
      _
    $region43: #{tpu_custom_call.1} parent=1 // pred_check_branch
      %40 = sbr.rel (0) target = $region45
    $region44: #{tpu_custom_call.1} parent=1 // pred_region
      _
    $region45: #{tpu_custom_call.1} parent=1 // pred_fallthru
      _
    // Predicated region
    $region46: #{tpu_custom_call.1} parent=1 // pred_check
      _
    $region47: #{tpu_custom_call.1} parent=1 // pred_check_branch
      %42 = sbr.rel (0) target = $region49
    $region48: #{tpu_custom_call.1} parent=1 // pred_region
      _
    $region49: #{tpu_custom_call.1} parent=1 // pred_fallthru
      _
    // Predicated region
    $region50: #{tpu_custom_call.1} parent=1 // pred_check
      _
    $region51: #{tpu_custom_call.1} parent=1 // pred_check_branch
      %44 = sbr.rel (0) target = $region53
    $region52: #{tpu_custom_call.1} parent=1 // pred_region
      _
    $region53: #{tpu_custom_call.1} parent=1 // pred_fallthru
      _
    %v45 = vld [vmem:[%s0] sm:$0xff]
    %v46 = vld [vmem:[%s0 + $0x8] sm:$0xff]
    %v47 = vld [vmem:[%s0 + $0x10] sm:$0xff]
    %v48 = vld [vmem:[%s0 + $0x18] sm:$0xff]
    %v49 = vld [vmem:[%s0 + $0x20] sm:$0xff]
    %v50 = vld [vmem:[%s0 + $0x28] sm:$0xff]
    %v51 = vld [vmem:[%s0 + $0x30] sm:$0xff]
    %v52 = vld [vmem:[%s0 + $0x38] sm:$0xff]
    %v53 = vld [vmem:[%s0 + $0x40] sm:$0xff]
    %v54 = vld [vmem:[%s0 + $0x48] sm:$0xff]
    %v55 = vld [vmem:[%s0 + $0x50] sm:$0xff]
    %v56 = vld [vmem:[%s0 + $0x58] sm:$0xff]
    %v57 = vld [vmem:[%s0 + $0x60] sm:$0xff]
    %v58 = vld [vmem:[%s0 + $0x68] sm:$0xff]
    %v59 = vld [vmem:[%s0 + $0x70] sm:$0xff]
    %v60 = vld [vmem:[%s0 + $0x78] sm:$0xff]
    %v61 = vld [vmem:[%s1] sm:$0xff]
    %v62 = vld [vmem:[%s1 + $0x8] sm:$0xff]
    %v63 = vld [vmem:[%s1 + $0x10] sm:$0xff]
    %v64 = vld [vmem:[%s1 + $0x18] sm:$0xff]
    %v65 = vld [vmem:[%s2] sm:$0xff]
    %v66 = vld [vmem:[%s2 + $0x8] sm:$0xff]
    %v67 = vld [vmem:[%s2 + $0x10] sm:$0xff]
    %v68 = vld [vmem:[%s2 + $0x18] sm:$0xff]
    %v69 = vld [vmem:[%s3] sm:$0xff]
    %v70 = vld [vmem:[%s3 + $0x8] sm:$0xff]
    %v71 = vld [vmem:[%s3 + $0x10] sm:$0xff]
    %v72 = vld [vmem:[%s3 + $0x18] sm:$0xff]
    %74 = vset.pattern.permute.xlu0 0
    %75 = vperm.xlu0 %74, %v69
    %v76 = vpop.permute.xlu0 %75
    %79 = vset.pattern.permute.xlu0 0
    %80 = vperm.xlu0 %79, %v70
    %v81 = vpop.permute.xlu0 %80
    %84 = vset.pattern.permute.xlu0 0
    %85 = vperm.xlu0 %84, %v71
    %v86 = vpop.permute.xlu0 %85
    %89 = vset.pattern.permute.xlu0 0
    %90 = vperm.xlu0 %89, %v72
    %v91 = vpop.permute.xlu0 %90
    %vm93 = vcmask 64512
    %v95 = vsel %vm93, %v65, 0
    %v98 = vsel %vm93, %v66, 0
    %v101 = vsel %vm93, %v67, 0
    %v104 = vsel %vm93, %v68, 0
    %106 = vmatprep.subr.mxu0 %v62
    %107 = vmatpush1.msra.mxu0 %v61
    %108 = vmatprep.subr.mxu0 0.0
    %109 = vmatpush1.msra.mxu0 0.0
    %110 = vmatprep.subr.mxu0 0.0
    %111 = vmatpush1.msra.mxu0 0.0
    %112 = vmatprep.subr.mxu0 0.0
    %113 = vmatpush1.msra.mxu0 0.0
    %114 = vmatprep.subr.mxu0 0.0
    %115 = vmatpush1.msra.mxu0 0.0
    %116 = vmatprep.subr.mxu0 0.0
    %117 = vmatpush1.msra.mxu0 0.0
    %118 = vmatprep.subr.mxu0 0.0
    %119 = vmatpush1.msra.mxu0 0.0
    %120 = vmatprep.subr.mxu0 0.0
    %121 = vmatpush1.msra.mxu0 0.0
    %122 = vmatprep.subr.mxu0 0.0
    %123 = vmatpush1.msra.mxu0 0.0
    %124 = vmatprep.subr.mxu0 0.0
    %125 = vmatpush1.msra.mxu0 0.0
    %126 = vmatprep.subr.mxu0 0.0
    %127 = vmatpush1.msra.mxu0 0.0
    %128 = vmatprep.subr.mxu0 0.0
    %129 = vmatpush1.msra.mxu0 0.0
    %130 = vmatprep.subr.mxu0 0.0
    %131 = vmatpush1.msra.mxu0 0.0
    %132 = vmatprep.subr.mxu0 0.0
    %133 = vmatpush1.msra.mxu0 0.0
    %134 = vmatprep.subr.mxu0 0.0
    %135 = vmatpush1.msra.mxu0 0.0
    %136 = vmatprep.subr.mxu0 0.0
    %137 = vmatpush1.msra.mxu0 0.0
    %138 = vmatprep.subr.mxu0 0.0
    %139 = vmatpush1.msra.mxu0 0.0
    %140 = vmatprep.subr.mxu0 0.0
    %141 = vmatpush1.msra.mxu0 0.0
    %142 = vmatprep.subr.mxu0 0.0
    %143 = vmatpush1.msra.mxu0 0.0
    %144 = vmatprep.subr.mxu0 0.0
    %145 = vmatpush1.msra.mxu0 0.0
    %146 = vmatprep.subr.mxu0 0.0
    %147 = vmatpush1.msra.mxu0 0.0
    %148 = vmatprep.subr.mxu0 0.0
    %149 = vmatpush1.msra.mxu0 0.0
    %150 = vmatprep.subr.mxu0 0.0
    %151 = vmatpush1.msra.mxu0 0.0
    %152 = vmatprep.subr.mxu0 0.0
    %153 = vmatpush1.msra.mxu0 0.0
    %154 = vmatprep.subr.mxu0 0.0
    %155 = vmatpush1.msra.mxu0 0.0
    %156 = vmatprep.subr.mxu0 0.0
    %157 = vmatpush1.msra.mxu0 0.0
    %158 = vmatprep.subr.mxu0 0.0
    %159 = vmatpush1.msra.mxu0 0.0
    %160 = vmatprep.subr.mxu0 0.0
    %161 = vmatpush1.msra.mxu0 0.0
    %162 = vmatprep.subr.mxu0 0.0
    %163 = vmatpush1.msra.mxu0 0.0
    %164 = vmatprep.subr.mxu0 0.0
    %165 = vmatpush1.msra.mxu0 0.0
    %166 = vmatprep.subr.mxu0 0.0
    %167 = vmatpush1.msra.mxu0 0.0
    %168 = vmatprep.subr.mxu0 0.0
    %169 = vmatpush1.msra.mxu0 0.0
    %170 = vmatprep.mubr.f32.mxu0 0.0
    %171 = vmatmul.mubr.f32.gmra.mrb[0].mxu0 %v95
    %v172 = vpop.f32.mrb[0].mxu0
    %v173 = vadd.f32 %v76, %v172
    %v174 = vpop.f32.mrb[0].mxu0
    %v175 = vadd.f32 %v76, %v174
    %176 = vmatprep.mubr.f32.mxu0 0.0
    %177 = vmatmul.mubr.f32.gmra.mrb[0].mxu0 %v98
    %v178 = vpop.f32.mrb[0].mxu0
    %v179 = vadd.f32 %v81, %v178
    %v180 = vpop.f32.mrb[0].mxu0
    %v181 = vadd.f32 %v81, %v180
    %182 = vmatprep.mubr.f32.mxu0 0.0
    %183 = vmatmul.mubr.f32.gmra.mrb[0].mxu0 %v101
    %v184 = vpop.f32.mrb[0].mxu0
    %v185 = vadd.f32 %v86, %v184
    %v186 = vpop.f32.mrb[0].mxu0
    %v187 = vadd.f32 %v86, %v186
    %188 = vmatprep.mubr.f32.mxu0 0.0
    %189 = vmatmul.mubr.f32.gmra.mrb[0].mxu0 %v104
    %v190 = vpop.f32.mrb[0].mxu0
    %v191 = vadd.f32 %v91, %v190
    %v192 = vpop.f32.mrb[0].mxu0
    %v193 = vadd.f32 %v91, %v192
    %194 = vdwg.mxu0
    %195 = vmatprep.subr.mxu0 %v64
    %196 = vmatpush1.msra.mxu0 %v63
    %197 = vmatprep.subr.mxu0 0.0
    %198 = vmatpush1.msra.mxu0 0.0
    %199 = vmatprep.subr.mxu0 0.0
    %200 = vmatpush1.msra.mxu0 0.0
    %201 = vmatprep.subr.mxu0 0.0
    %202 = vmatpush1.msra.mxu0 0.0
    %203 = vmatprep.subr.mxu0 0.0
    %204 = vmatpush1.msra.mxu0 0.0
    %205 = vmatprep.subr.mxu0 0.0
    %206 = vmatpush1.msra.mxu0 0.0
    %207 = vmatprep.subr.mxu0 0.0
    %208 = vmatpush1.msra.mxu0 0.0
    %209 = vmatprep.subr.mxu0 0.0
    %210 = vmatpush1.msra.mxu0 0.0
    %211 = vmatprep.subr.mxu0 0.0
    %212 = vmatpush1.msra.mxu0 0.0
    %213 = vmatprep.subr.mxu0 0.0
    %214 = vmatpush1.msra.mxu0 0.0
    %215 = vmatprep.subr.mxu0 0.0
    %216 = vmatpush1.msra.mxu0 0.0
    %217 = vmatprep.subr.mxu0 0.0
    %218 = vmatpush1.msra.mxu0 0.0
    %219 = vmatprep.subr.mxu0 0.0
    %220 = vmatpush1.msra.mxu0 0.0
    %221 = vmatprep.subr.mxu0 0.0
    %222 = vmatpush1.msra.mxu0 0.0
    %223 = vmatprep.subr.mxu0 0.0
    %224 = vmatpush1.msra.mxu0 0.0
    %225 = vmatprep.subr.mxu0 0.0
    %226 = vmatpush1.msra.mxu0 0.0
    %227 = vmatprep.subr.mxu0 0.0
    %228 = vmatpush1.msra.mxu0 0.0
    %229 = vmatprep.subr.mxu0 0.0
    %230 = vmatpush1.msra.mxu0 0.0
    %231 = vmatprep.subr.mxu0 0.0
    %232 = vmatpush1.msra.mxu0 0.0
    %233 = vmatprep.subr.mxu0 0.0
    %234 = vmatpush1.msra.mxu0 0.0
    %235 = vmatprep.subr.mxu0 0.0
    %236 = vmatpush1.msra.mxu0 0.0
    %237 = vmatprep.subr.mxu0 0.0
    %238 = vmatpush1.msra.mxu0 0.0
    %239 = vmatprep.subr.mxu0 0.0
    %240 = vmatpush1.msra.mxu0 0.0
    %241 = vmatprep.subr.mxu0 0.0
    %242 = vmatpush1.msra.mxu0 0.0
    %243 = vmatprep.subr.mxu0 0.0
    %244 = vmatpush1.msra.mxu0 0.0
    %245 = vmatprep.subr.mxu0 0.0
    %246 = vmatpush1.msra.mxu0 0.0
    %247 = vmatprep.subr.mxu0 0.0
    %248 = vmatpush1.msra.mxu0 0.0
    %249 = vmatprep.subr.mxu0 0.0
    %250 = vmatpush1.msra.mxu0 0.0
    %251 = vmatprep.subr.mxu0 0.0
    %252 = vmatpush1.msra.mxu0 0.0
    %253 = vmatprep.subr.mxu0 0.0
    %254 = vmatpush1.msra.mxu0 0.0
    %255 = vmatprep.subr.mxu0 0.0
    %256 = vmatpush1.msra.mxu0 0.0
    %257 = vmatprep.subr.mxu0 0.0
    %258 = vmatpush1.msra.mxu0 0.0
    %259 = vmatprep.mubr.f32.mxu0 0.0
    %260 = vmatmul.mubr.f32.gmra.mrb[0].mxu0 %v95
    %v261 = vpop.f32.mrb[0].mxu0
    %v262 = vadd.f32 %v76, %v261
    %v263 = vpop.f32.mrb[0].mxu0
    %v264 = vadd.f32 %v76, %v263
    %265 = vmatprep.mubr.f32.mxu0 0.0
    %266 = vmatmul.mubr.f32.gmra.mrb[0].mxu0 %v98
    %v267 = vpop.f32.mrb[0].mxu0
    %v268 = vadd.f32 %v81, %v267
    %v269 = vpop.f32.mrb[0].mxu0
    %v270 = vadd.f32 %v81, %v269
    %271 = vmatprep.mubr.f32.mxu0 0.0
    %272 = vmatmul.mubr.f32.gmra.mrb[0].mxu0 %v101
    %v273 = vpop.f32.mrb[0].mxu0
    %v274 = vadd.f32 %v86, %v273
    %v275 = vpop.f32.mrb[0].mxu0
    %v276 = vadd.f32 %v86, %v275
    %277 = vmatprep.mubr.f32.mxu0 0.0
    %278 = vmatmul.mubr.f32.gmra.mrb[0].mxu0 %v104
    %v279 = vpop.f32.mrb[0].mxu0
    %v280 = vadd.f32 %v91, %v279
    %v281 = vpop.f32.mrb[0].mxu0
    %v282 = vadd.f32 %v91, %v281
    %283 = vdwg.mxu0
    %v284 = vld [vmem:[%s4] sm:$0xff]
    %v285 = vld [vmem:[%s4 + $0x8] sm:$0xff]
    %v286 = vld [vmem:[%s4 + $0x10] sm:$0xff]
    %v287 = vld [vmem:[%s4 + $0x18] sm:$0xff]
    %v288 = vld [vmem:[%s4 + $0x20] sm:$0xff]
    %v289 = vld [vmem:[%s5] sm:$0xff]
    %v290 = vld [vmem:[%s5 + $0x8] sm:$0xff]
    %v291 = vld [vmem:[%s5 + $0x10] sm:$0xff]
    %v292 = vld [vmem:[%s5 + $0x18] sm:$0xff]
    %v293 = vld [vmem:[%s5 + $0x20] sm:$0xff]
    %v295 = vsel %vm93, %v289, 0
    %v298 = vsel %vm93, %v290, 0
    %v301 = vsel %vm93, %v291, 0
    %v304 = vsel %vm93, %v292, 0
    %v307 = vsel %vm93, %v293, 0
    %309 = vmatprep.subr.mxu0 %v62
    %310 = vmatpush1.msra.mxu0 %v61
    %311 = vmatprep.subr.mxu0 0.0
    %312 = vmatpush1.msra.mxu0 0.0
    %313 = vmatprep.subr.mxu0 0.0
    %314 = vmatpush1.msra.mxu0 0.0
    %315 = vmatprep.subr.mxu0 0.0
    %316 = vmatpush1.msra.mxu0 0.0
    %317 = vmatprep.subr.mxu0 0.0
    %318 = vmatpush1.msra.mxu0 0.0
    %319 = vmatprep.subr.mxu0 0.0
    %320 = vmatpush1.msra.mxu0 0.0
    %321 = vmatprep.subr.mxu0 0.0
    %322 = vmatpush1.msra.mxu0 0.0
    %323 = vmatprep.subr.mxu0 0.0
    %324 = vmatpush1.msra.mxu0 0.0
    %325 = vmatprep.subr.mxu0 0.0
    %326 = vmatpush1.msra.mxu0 0.0
    %327 = vmatprep.subr.mxu0 0.0
    %328 = vmatpush1.msra.mxu0 0.0
    %329 = vmatprep.subr.mxu0 0.0
    %330 = vmatpush1.msra.mxu0 0.0
    %331 = vmatprep.subr.mxu0 0.0
    %332 = vmatpush1.msra.mxu0 0.0
    %333 = vmatprep.subr.mxu0 0.0
    %334 = vmatpush1.msra.mxu0 0.0
    %335 = vmatprep.subr.mxu0 0.0
    %336 = vmatpush1.msra.mxu0 0.0
    %337 = vmatprep.subr.mxu0 0.0
    %338 = vmatpush1.msra.mxu0 0.0
    %339 = vmatprep.subr.mxu0 0.0
    %340 = vmatpush1.msra.mxu0 0.0
    %341 = vmatprep.subr.mxu0 0.0
    %342 = vmatpush1.msra.mxu0 0.0
    %343 = vmatprep.subr.mxu0 0.0
    %344 = vmatpush1.msra.mxu0 0.0
    %345 = vmatprep.subr.mxu0 0.0
    %346 = vmatpush1.msra.mxu0 0.0
    %347 = vmatprep.subr.mxu0 0.0
    %348 = vmatpush1.msra.mxu0 0.0
    %349 = vmatprep.subr.mxu0 0.0
    %350 = vmatpush1.msra.mxu0 0.0
    %351 = vmatprep.subr.mxu0 0.0
    %352 = vmatpush1.msra.mxu0 0.0
    %353 = vmatprep.subr.mxu0 0.0
    %354 = vmatpush1.msra.mxu0 0.0
    %355 = vmatprep.subr.mxu0 0.0
    %356 = vmatpush1.msra.mxu0 0.0
    %357 = vmatprep.subr.mxu0 0.0
    %358 = vmatpush1.msra.mxu0 0.0
    %359 = vmatprep.subr.mxu0 0.0
    %360 = vmatpush1.msra.mxu0 0.0
    %361 = vmatprep.subr.mxu0 0.0
    %362 = vmatpush1.msra.mxu0 0.0
    %363 = vmatprep.subr.mxu0 0.0
    %364 = vmatpush1.msra.mxu0 0.0
    %365 = vmatprep.subr.mxu0 0.0
    %366 = vmatpush1.msra.mxu0 0.0
    %367 = vmatprep.subr.mxu0 0.0
    %368 = vmatpush1.msra.mxu0 0.0
    %369 = vmatprep.subr.mxu0 0.0
    %370 = vmatpush1.msra.mxu0 0.0
    %371 = vmatprep.subr.mxu0 0.0
    %372 = vmatpush1.msra.mxu0 0.0
    %373 = vmatprep.mubr.f32.mxu0 0.0
    %374 = vmatmul.mubr.f32.gmra.mrb[0].mxu0 %v295
    %v375 = vpop.f32.mrb[0].mxu0
    %v376 = vadd.f32 0.0, %v375
    %v377 = vpop.f32.mrb[0].mxu0
    %v378 = vadd.f32 0.0, %v377
    %379 = vmatprep.mubr.f32.mxu0 0.0
    %380 = vmatmul.mubr.f32.gmra.mrb[0].mxu0 %v298
    %v381 = vpop.f32.mrb[0].mxu0
    %v382 = vadd.f32 0.0, %v381
    %v383 = vpop.f32.mrb[0].mxu0
    %v384 = vadd.f32 0.0, %v383
    %385 = vmatprep.mubr.f32.mxu0 0.0
    %386 = vmatmul.mubr.f32.gmra.mrb[0].mxu0 %v301
    %v387 = vpop.f32.mrb[0].mxu0
    %v388 = vadd.f32 0.0, %v387
    %v389 = vpop.f32.mrb[0].mxu0
    %v390 = vadd.f32 0.0, %v389
    %391 = vmatprep.mubr.f32.mxu0 0.0
    %392 = vmatmul.mubr.f32.gmra.mrb[0].mxu0 %v304
    %v393 = vpop.f32.mrb[0].mxu0
    %v394 = vadd.f32 0.0, %v393
    %v395 = vpop.f32.mrb[0].mxu0
    %v396 = vadd.f32 0.0, %v395
    %397 = vmatprep.mubr.f32.mxu0 0.0
    %398 = vmatmul.mubr.f32.gmra.mrb[0].mxu0 %v307
    %v399 = vpop.f32.mrb[0].mxu0
    %v400 = vadd.f32 0.0, %v399
    %v401 = vpop.f32.mrb[0].mxu0
    %v402 = vadd.f32 0.0, %v401
    %403 = vdwg.mxu0
    %404 = vmatprep.subr.mxu0 %v64
    %405 = vmatpush1.msra.mxu0 %v63
    %406 = vmatprep.subr.mxu0 0.0
    %407 = vmatpush1.msra.mxu0 0.0
    %408 = vmatprep.subr.mxu0 0.0
    %409 = vmatpush1.msra.mxu0 0.0
    %410 = vmatprep.subr.mxu0 0.0
    %411 = vmatpush1.msra.mxu0 0.0
    %412 = vmatprep.subr.mxu0 0.0
    %413 = vmatpush1.msra.mxu0 0.0
    %414 = vmatprep.subr.mxu0 0.0
    %415 = vmatpush1.msra.mxu0 0.0
    %416 = vmatprep.subr.mxu0 0.0
    %417 = vmatpush1.msra.mxu0 0.0
    %418 = vmatprep.subr.mxu0 0.0
    %419 = vmatpush1.msra.mxu0 0.0
    %420 = vmatprep.subr.mxu0 0.0
    %421 = vmatpush1.msra.mxu0 0.0
    %422 = vmatprep.subr.mxu0 0.0
    %423 = vmatpush1.msra.mxu0 0.0
    %424 = vmatprep.subr.mxu0 0.0
    %425 = vmatpush1.msra.mxu0 0.0
    %426 = vmatprep.subr.mxu0 0.0
    %427 = vmatpush1.msra.mxu0 0.0
    %428 = vmatprep.subr.mxu0 0.0
    %429 = vmatpush1.msra.mxu0 0.0
    %430 = vmatprep.subr.mxu0 0.0
    %431 = vmatpush1.msra.mxu0 0.0
    %432 = vmatprep.subr.mxu0 0.0
    %433 = vmatpush1.msra.mxu0 0.0
    %434 = vmatprep.subr.mxu0 0.0
    %435 = vmatpush1.msra.mxu0 0.0
    %436 = vmatprep.subr.mxu0 0.0
    %437 = vmatpush1.msra.mxu0 0.0
    %438 = vmatprep.subr.mxu0 0.0
    %439 = vmatpush1.msra.mxu0 0.0
    %440 = vmatprep.subr.mxu0 0.0
    %441 = vmatpush1.msra.mxu0 0.0
    %442 = vmatprep.subr.mxu0 0.0
    %443 = vmatpush1.msra.mxu0 0.0
    %444 = vmatprep.subr.mxu0 0.0
    %445 = vmatpush1.msra.mxu0 0.0
    %446 = vmatprep.subr.mxu0 0.0
    %447 = vmatpush1.msra.mxu0 0.0
    %448 = vmatprep.subr.mxu0 0.0
    %449 = vmatpush1.msra.mxu0 0.0
    %450 = vmatprep.subr.mxu0 0.0
    %451 = vmatpush1.msra.mxu0 0.0
    %452 = vmatprep.subr.mxu0 0.0
    %453 = vmatpush1.msra.mxu0 0.0
    %454 = vmatprep.subr.mxu0 0.0
    %455 = vmatpush1.msra.mxu0 0.0
    %456 = vmatprep.subr.mxu0 0.0
    %457 = vmatpush1.msra.mxu0 0.0
    %458 = vmatprep.subr.mxu0 0.0
    %459 = vmatpush1.msra.mxu0 0.0
    %460 = vmatprep.subr.mxu0 0.0
    %461 = vmatpush1.msra.mxu0 0.0
    %462 = vmatprep.subr.mxu0 0.0
    %463 = vmatpush1.msra.mxu0 0.0
    %464 = vmatprep.subr.mxu0 0.0
    %465 = vmatpush1.msra.mxu0 0.0
    %466 = vmatprep.subr.mxu0 0.0
    %467 = vmatpush1.msra.mxu0 0.0
    %468 = vmatprep.mubr.f32.mxu0 0.0
    %469 = vmatmul.mubr.f32.gmra.mrb[0].mxu0 %v295
    %v470 = vpop.f32.mrb[0].mxu0
    %v471 = vadd.f32 0.0, %v470
    %v472 = vpop.f32.mrb[0].mxu0
    %v473 = vadd.f32 0.0, %v472
    %474 = vmatprep.mubr.f32.mxu0 0.0
    %475 = vmatmul.mubr.f32.gmra.mrb[0].mxu0 %v298
    %v476 = vpop.f32.mrb[0].mxu0
    %v477 = vadd.f32 0.0, %v476
    %v478 = vpop.f32.mrb[0].mxu0
    %v479 = vadd.f32 0.0, %v478
    %480 = vmatprep.mubr.f32.mxu0 0.0
    %481 = vmatmul.mubr.f32.gmra.mrb[0].mxu0 %v301
    %v482 = vpop.f32.mrb[0].mxu0
    %v483 = vadd.f32 0.0, %v482
    %v484 = vpop.f32.mrb[0].mxu0
    %v485 = vadd.f32 0.0, %v484
    %486 = vmatprep.mubr.f32.mxu0 0.0
    %487 = vmatmul.mubr.f32.gmra.mrb[0].mxu0 %v304
    %v488 = vpop.f32.mrb[0].mxu0
    %v489 = vadd.f32 0.0, %v488
    %v490 = vpop.f32.mrb[0].mxu0
    %v491 = vadd.f32 0.0, %v490
    %492 = vmatprep.mubr.f32.mxu0 0.0
    %493 = vmatmul.mubr.f32.gmra.mrb[0].mxu0 %v307
    %v494 = vpop.f32.mrb[0].mxu0
    %v495 = vadd.f32 0.0, %v494
    %v496 = vpop.f32.mrb[0].mxu0
    %v497 = vadd.f32 0.0, %v496
    %498 = vdwg.mxu0
    %vm499 = vcmask 261120
    %v501 = vsel %vm499, %v284, 0
    %v504 = vsel %vm499, %v285, 0
    %v507 = vsel %vm499, %v286, 0
    %v510 = vsel %vm499, %v287, 0
    %v513 = vsel %vm499, %v288, 0
    %515 = vmatprep.subr.mxu0 %v46
    %516 = vmatpush1.msra.mxu0 %v45
    %517 = vmatprep.subr.mxu0 %v50
    %518 = vmatpush1.msra.mxu0 %v49
    %519 = vmatprep.subr.mxu0 %v54
    %520 = vmatpush1.msra.mxu0 %v53
    %521 = vmatprep.subr.mxu0 %v58
    %522 = vmatpush1.msra.mxu0 %v57
    %523 = vmatprep.subr.mxu0 0.0
    %524 = vmatpush1.msra.mxu0 0.0
    %525 = vmatprep.subr.mxu0 0.0
    %526 = vmatpush1.msra.mxu0 0.0
    %527 = vmatprep.subr.mxu0 0.0
    %528 = vmatpush1.msra.mxu0 0.0
    %529 = vmatprep.subr.mxu0 0.0
    %530 = vmatpush1.msra.mxu0 0.0
    %531 = vmatprep.subr.mxu0 0.0
    %532 = vmatpush1.msra.mxu0 0.0
    %533 = vmatprep.subr.mxu0 0.0
    %534 = vmatpush1.msra.mxu0 0.0
    %535 = vmatprep.subr.mxu0 0.0
    %536 = vmatpush1.msra.mxu0 0.0
    %537 = vmatprep.subr.mxu0 0.0
    %538 = vmatpush1.msra.mxu0 0.0
    %539 = vmatprep.subr.mxu0 0.0
    %540 = vmatpush1.msra.mxu0 0.0
    %541 = vmatprep.subr.mxu0 0.0
    %542 = vmatpush1.msra.mxu0 0.0
    %543 = vmatprep.subr.mxu0 0.0
    %544 = vmatpush1.msra.mxu0 0.0
    %545 = vmatprep.subr.mxu0 0.0
    %546 = vmatpush1.msra.mxu0 0.0
    %547 = vmatprep.subr.mxu0 0.0
    %548 = vmatpush1.msra.mxu0 0.0
    %549 = vmatprep.subr.mxu0 0.0
    %550 = vmatpush1.msra.mxu0 0.0
    %551 = vmatprep.subr.mxu0 0.0
    %552 = vmatpush1.msra.mxu0 0.0
    %553 = vmatprep.subr.mxu0 0.0
    %554 = vmatpush1.msra.mxu0 0.0
    %555 = vmatprep.subr.mxu0 0.0
    %556 = vmatpush1.msra.mxu0 0.0
    %557 = vmatprep.subr.mxu0 0.0
    %558 = vmatpush1.msra.mxu0 0.0
    %559 = vmatprep.subr.mxu0 0.0
    %560 = vmatpush1.msra.mxu0 0.0
    %561 = vmatprep.subr.mxu0 0.0
    %562 = vmatpush1.msra.mxu0 0.0
    %563 = vmatprep.subr.mxu0 0.0
    %564 = vmatpush1.msra.mxu0 0.0
    %565 = vmatprep.subr.mxu0 0.0
    %566 = vmatpush1.msra.mxu0 0.0
    %567 = vmatprep.subr.mxu0 0.0
    %568 = vmatpush1.msra.mxu0 0.0
    %569 = vmatprep.subr.mxu0 0.0
    %570 = vmatpush1.msra.mxu0 0.0
    %571 = vmatprep.subr.mxu0 0.0
    %572 = vmatpush1.msra.mxu0 0.0
    %573 = vmatprep.subr.mxu0 0.0
    %574 = vmatpush1.msra.mxu0 0.0
    %575 = vmatprep.subr.mxu0 0.0
    %576 = vmatpush1.msra.mxu0 0.0
    %577 = vmatprep.subr.mxu0 0.0
    %578 = vmatpush1.msra.mxu0 0.0
    %579 = vmatprep.mubr.f32.mxu0 0.0
    %580 = vmatmul.mubr.f32.gmra.mrb[0].mxu0 %v501
    %v581 = vpop.f32.mrb[0].mxu0
    %v582 = vadd.f32 %v376, %v581
    %v583 = vpop.f32.mrb[0].mxu0
    %v584 = vadd.f32 %v378, %v583
    %585 = vmatprep.mubr.f32.mxu0 0.0
    %586 = vmatmul.mubr.f32.gmra.mrb[0].mxu0 %v504
    %v587 = vpop.f32.mrb[0].mxu0
    %v588 = vadd.f32 %v382, %v587
    %v589 = vpop.f32.mrb[0].mxu0
    %v590 = vadd.f32 %v384, %v589
    %591 = vmatprep.mubr.f32.mxu0 0.0
    %592 = vmatmul.mubr.f32.gmra.mrb[0].mxu0 %v507
    %v593 = vpop.f32.mrb[0].mxu0
    %v594 = vadd.f32 %v388, %v593
    %v595 = vpop.f32.mrb[0].mxu0
    %v596 = vadd.f32 %v390, %v595
    %597 = vmatprep.mubr.f32.mxu0 0.0
    %598 = vmatmul.mubr.f32.gmra.mrb[0].mxu0 %v510
    %v599 = vpop.f32.mrb[0].mxu0
    %v600 = vadd.f32 %v394, %v599
    %v601 = vpop.f32.mrb[0].mxu0
    %v602 = vadd.f32 %v396, %v601
    %603 = vmatprep.mubr.f32.mxu0 0.0
    %604 = vmatmul.mubr.f32.gmra.mrb[0].mxu0 %v513
    %v605 = vpop.f32.mrb[0].mxu0
    %v606 = vadd.f32 %v400, %v605
    %v607 = vpop.f32.mrb[0].mxu0
    %v608 = vadd.f32 %v402, %v607
    %609 = vdwg.mxu0
    %610 = vmatprep.subr.mxu0 %v48
    %611 = vmatpush1.msra.mxu0 %v47
    %612 = vmatprep.subr.mxu0 %v52
    %613 = vmatpush1.msra.mxu0 %v51
    %614 = vmatprep.subr.mxu0 %v56
    %615 = vmatpush1.msra.mxu0 %v55
    %616 = vmatprep.subr.mxu0 %v60
    %617 = vmatpush1.msra.mxu0 %v59
    %618 = vmatprep.subr.mxu0 0.0
    %619 = vmatpush1.msra.mxu0 0.0
    %620 = vmatprep.subr.mxu0 0.0
    %621 = vmatpush1.msra.mxu0 0.0
    %622 = vmatprep.subr.mxu0 0.0
    %623 = vmatpush1.msra.mxu0 0.0
    %624 = vmatprep.subr.mxu0 0.0
    %625 = vmatpush1.msra.mxu0 0.0
    %626 = vmatprep.subr.mxu0 0.0
    %627 = vmatpush1.msra.mxu0 0.0
    %628 = vmatprep.subr.mxu0 0.0
    %629 = vmatpush1.msra.mxu0 0.0
    %630 = vmatprep.subr.mxu0 0.0
    %631 = vmatpush1.msra.mxu0 0.0
    %632 = vmatprep.subr.mxu0 0.0
    %633 = vmatpush1.msra.mxu0 0.0
    %634 = vmatprep.subr.mxu0 0.0
    %635 = vmatpush1.msra.mxu0 0.0
    %636 = vmatprep.subr.mxu0 0.0
    %637 = vmatpush1.msra.mxu0 0.0
    %638 = vmatprep.subr.mxu0 0.0
    %639 = vmatpush1.msra.mxu0 0.0
    %640 = vmatprep.subr.mxu0 0.0
    %641 = vmatpush1.msra.mxu0 0.0
    %642 = vmatprep.subr.mxu0 0.0
    %643 = vmatpush1.msra.mxu0 0.0
    %644 = vmatprep.subr.mxu0 0.0
    %645 = vmatpush1.msra.mxu0 0.0
    %646 = vmatprep.subr.mxu0 0.0
    %647 = vmatpush1.msra.mxu0 0.0
    %648 = vmatprep.subr.mxu0 0.0
    %649 = vmatpush1.msra.mxu0 0.0
    %650 = vmatprep.subr.mxu0 0.0
    %651 = vmatpush1.msra.mxu0 0.0
    %652 = vmatprep.subr.mxu0 0.0
    %653 = vmatpush1.msra.mxu0 0.0
    %654 = vmatprep.subr.mxu0 0.0
    %655 = vmatpush1.msra.mxu0 0.0
    %656 = vmatprep.subr.mxu0 0.0
    %657 = vmatpush1.msra.mxu0 0.0
    %658 = vmatprep.subr.mxu0 0.0
    %659 = vmatpush1.msra.mxu0 0.0
    %660 = vmatprep.subr.mxu0 0.0
    %661 = vmatpush1.msra.mxu0 0.0
    %662 = vmatprep.subr.mxu0 0.0
    %663 = vmatpush1.msra.mxu0 0.0
    %664 = vmatprep.subr.mxu0 0.0
    %665 = vmatpush1.msra.mxu0 0.0
    %666 = vmatprep.subr.mxu0 0.0
    %667 = vmatpush1.msra.mxu0 0.0
    %668 = vmatprep.subr.mxu0 0.0
    %669 = vmatpush1.msra.mxu0 0.0
    %670 = vmatprep.subr.mxu0 0.0
    %671 = vmatpush1.msra.mxu0 0.0
    %672 = vmatprep.subr.mxu0 0.0
    %673 = vmatpush1.msra.mxu0 0.0
    %674 = vmatprep.mubr.f32.mxu0 0.0
    %675 = vmatmul.mubr.f32.gmra.mrb[0].mxu0 %v501
    %v676 = vpop.f32.mrb[0].mxu0
    %v677 = vadd.f32 %v471, %v676
    %v678 = vpop.f32.mrb[0].mxu0
    %v679 = vadd.f32 %v473, %v678
    %680 = vmatprep.mubr.f32.mxu0 0.0
    %681 = vmatmul.mubr.f32.gmra.mrb[0].mxu0 %v504
    %v682 = vpop.f32.mrb[0].mxu0
    %v683 = vadd.f32 %v477, %v682
    %v684 = vpop.f32.mrb[0].mxu0
    %v685 = vadd.f32 %v479, %v684
    %686 = vmatprep.mubr.f32.mxu0 0.0
    %687 = vmatmul.mubr.f32.gmra.mrb[0].mxu0 %v507
    %v688 = vpop.f32.mrb[0].mxu0
    %v689 = vadd.f32 %v483, %v688
    %v690 = vpop.f32.mrb[0].mxu0
    %v691 = vadd.f32 %v485, %v690
    %692 = vmatprep.mubr.f32.mxu0 0.0
    %693 = vmatmul.mubr.f32.gmra.mrb[0].mxu0 %v510
    %v694 = vpop.f32.mrb[0].mxu0
    %v695 = vadd.f32 %v489, %v694
    %v696 = vpop.f32.mrb[0].mxu0
    %v697 = vadd.f32 %v491, %v696
    %698 = vmatprep.mubr.f32.mxu0 0.0
    %699 = vmatmul.mubr.f32.gmra.mrb[0].mxu0 %v513
    %v700 = vpop.f32.mrb[0].mxu0
    %v701 = vadd.f32 %v495, %v700
    %v702 = vpop.f32.mrb[0].mxu0
    %v703 = vadd.f32 %v497, %v702
    %704 = vdwg.mxu0
    %v705 = vld [vmem:[%s6] sm:$0xff]
    %v706 = vld [vmem:[%s6 + $0x8] sm:$0xff]
    %v707 = vld [vmem:[%s6 + $0x10] sm:$0xff]
    %v708 = vld [vmem:[%s6 + $0x18] sm:$0xff]
    %v709 = vld [vmem:[%s6 + $0x20] sm:$0xff]
    %711 = vset.pattern.permute.xlu0 0
    %712 = vperm.xlu0 %711, %v705
    %v713 = vpop.permute.xlu0 %712
    %716 = vset.pattern.permute.xlu0 0
    %717 = vperm.xlu0 %716, %v706
    %v718 = vpop.permute.xlu0 %717
    %721 = vset.pattern.permute.xlu0 0
    %722 = vperm.xlu0 %721, %v707
    %v723 = vpop.permute.xlu0 %722
    %726 = vset.pattern.permute.xlu0 0
    %727 = vperm.xlu0 %726, %v708
    %v728 = vpop.permute.xlu0 %727
    %731 = vset.pattern.permute.xlu0 0
    %732 = vperm.xlu0 %731, %v709
    %v733 = vpop.permute.xlu0 %732
    %v735 = vadd.f32 %v582, %v713
    %v736 = vadd.f32 %v584, %v713
    %v737 = vadd.f32 %v677, %v713
    %v738 = vadd.f32 %v679, %v713
    %v739 = vadd.f32 %v588, %v718
    %v740 = vadd.f32 %v590, %v718
    %v741 = vadd.f32 %v683, %v718
    %v742 = vadd.f32 %v685, %v718
    %v743 = vadd.f32 %v594, %v723
    %v744 = vadd.f32 %v596, %v723
    %v745 = vadd.f32 %v689, %v723
    %v746 = vadd.f32 %v691, %v723
    %v747 = vadd.f32 %v600, %v728
    %v748 = vadd.f32 %v602, %v728
    %v749 = vadd.f32 %v695, %v728
    %v750 = vadd.f32 %v697, %v728
    %v751 = vadd.f32 %v606, %v733
    %v752 = vadd.f32 %v608, %v733
    %v753 = vadd.f32 %v701, %v733
    %v754 = vadd.f32 %v703, %v733
    %v755 = vld [vmem:[%s7] sm:$0xff]
    %v756 = vld [vmem:[%s7 + $0x8] sm:$0xff]
    %v757 = vld [vmem:[%s7 + $0x10] sm:$0xff]
    %v758 = vld [vmem:[%s7 + $0x18] sm:$0xff]
    %v759 = vxor.u32 %v735, 2147483648
    %v760 = vxor.u32 %v736, 2147483648
    %v761 = vxor.u32 %v737, 2147483648
    %v762 = vxor.u32 %v738, 2147483648
    %v763 = vxor.u32 %v739, 2147483648
    %v764 = vxor.u32 %v740, 2147483648
    %v765 = vxor.u32 %v741, 2147483648
    %v766 = vxor.u32 %v742, 2147483648
    %v767 = vmul.f32 %v759, 1.442695
    %v768 = vpow.pop %v767
    %v769 = vmul.f32 %v760, 1.442695
    %v770 = vpow.pop %v769
    %v771 = vmul.f32 %v761, 1.442695
    %v772 = vpow.pop %v771
    %v773 = vmul.f32 %v762, 1.442695
    %v774 = vpow.pop %v773
    %v775 = vmul.f32 %v763, 1.442695
    %v776 = vpow.pop %v775
    %v777 = vmul.f32 %v764, 1.442695
    %v778 = vpow.pop %v777
    %v779 = vmul.f32 %v765, 1.442695
    %v780 = vpow.pop %v779
    %v781 = vmul.f32 %v766, 1.442695
    %v782 = vpow.pop %v781
    %v783 = vadd.f32 %v768, 1.0
    %v784 = vadd.f32 %v770, 1.0
    %v785 = vadd.f32 %v772, 1.0
    %v786 = vadd.f32 %v774, 1.0
    %v787 = vadd.f32 %v776, 1.0
    %v788 = vadd.f32 %v778, 1.0
    %v789 = vadd.f32 %v780, 1.0
    %v790 = vadd.f32 %v782, 1.0
    %v791 = vrcp.pop %v783
    %v792 = vmul.f32 1.0, %v791
    %v793 = vrcp.pop %v784
    %v794 = vmul.f32 1.0, %v793
    %v795 = vrcp.pop %v785
    %v796 = vmul.f32 1.0, %v795
    %v797 = vrcp.pop %v786
    %v798 = vmul.f32 1.0, %v797
    %v799 = vrcp.pop %v787
    %v800 = vmul.f32 1.0, %v799
    %v801 = vrcp.pop %v788
    %v802 = vmul.f32 1.0, %v801
    %v803 = vrcp.pop %v789
    %v804 = vmul.f32 1.0, %v803
    %v805 = vrcp.pop %v790
    %v806 = vmul.f32 1.0, %v805
    %v807 = vmul.f32 %v735, %v792
    %v808 = vmul.f32 %v736, %v794
    %v809 = vmul.f32 %v737, %v796
    %v810 = vmul.f32 %v738, %v798
    %v811 = vmul.f32 %v739, %v800
    %v812 = vmul.f32 %v740, %v802
    %v813 = vmul.f32 %v741, %v804
    %v814 = vmul.f32 %v742, %v806
    %v815 = vld [vmem:[%s9] sm:$0xff]
    %v816 = vld [vmem:[%s9 + $0x8] sm:$0xff]
    %v817 = vld [vmem:[%s9 + $0x10] sm:$0xff]
    %v818 = vld [vmem:[%s9 + $0x18] sm:$0xff]
    %v819 = vld [vmem:[%s9 + $0x20] sm:$0xff]
    %v820 = vld [vmem:[%s9 + $0x28] sm:$0xff]
    %v821 = vld [vmem:[%s9 + $0x30] sm:$0xff]
    %v822 = vld [vmem:[%s9 + $0x38] sm:$0xff]
    %v823 = vld [vmem:[%s9 + $0x40] sm:$0xff]
    %v824 = vld [vmem:[%s9 + $0x48] sm:$0xff]
    %v825 = vld [vmem:[%s9 + $0x50] sm:$0xff]
    %v826 = vld [vmem:[%s9 + $0x58] sm:$0xff]
    %v827 = vld [vmem:[%s9 + $0x60] sm:$0xff]
    %v828 = vld [vmem:[%s9 + $0x68] sm:$0xff]
    %v829 = vld [vmem:[%s9 + $0x70] sm:$0xff]
    %v830 = vld [vmem:[%s9 + $0x78] sm:$0xff]
    %v831 = vld [vmem:[%s9 + $0x80] sm:$0xff]
    %v832 = vld [vmem:[%s9 + $0x88] sm:$0xff]
    %v833 = vld [vmem:[%s9 + $0x90] sm:$0xff]
    %v834 = vld [vmem:[%s9 + $0x98] sm:$0xff]
    %v835 = vld [vmem:[%s9 + $0xa0] sm:$0xff]
    %v836 = vld [vmem:[%s9 + $0xa8] sm:$0xff]
    %v837 = vld [vmem:[%s9 + $0xb0] sm:$0xff]
    %v838 = vld [vmem:[%s9 + $0xb8] sm:$0xff]
    %v839 = vld [vmem:[%s9 + $0xc0] sm:$0xff]
    %v840 = vld [vmem:[%s9 + $0xc8] sm:$0xff]
    %v841 = vld [vmem:[%s9 + $0xd0] sm:$0xff]
    %v842 = vld [vmem:[%s9 + $0xd8] sm:$0xff]
    %v843 = vld [vmem:[%s9 + $0xe0] sm:$0xff]
    %v844 = vld [vmem:[%s9 + $0xe8] sm:$0xff]
    %v845 = vld [vmem:[%s9 + $0xf0] sm:$0xff]
    %v846 = vld [vmem:[%s9 + $0xf8] sm:$0xff]
    %v847 = vld [vmem:[%s9 + $0x100] sm:$0xff]
    %v848 = vld [vmem:[%s9 + $0x108] sm:$0xff]
    %v849 = vld [vmem:[%s9 + $0x110] sm:$0xff]
    %v850 = vld [vmem:[%s9 + $0x118] sm:$0xff]
    %v851 = vld [vmem:[%s9 + $0x120] sm:$0xff]
    %v852 = vld [vmem:[%s9 + $0x128] sm:$0xff]
    %v853 = vld [vmem:[%s9 + $0x130] sm:$0xff]
    %v854 = vld [vmem:[%s9 + $0x138] sm:$0xff]
    %v855 = vld [vmem:[%s9 + $0x140] sm:$0xff]
    %v856 = vld [vmem:[%s9 + $0x148] sm:$0xff]
    %v857 = vld [vmem:[%s9 + $0x150] sm:$0xff]
    %v858 = vld [vmem:[%s9 + $0x158] sm:$0xff]
    %v859 = vld [vmem:[%s9 + $0x160] sm:$0xff]
    %v860 = vld [vmem:[%s9 + $0x168] sm:$0xff]
    %v861 = vld [vmem:[%s9 + $0x170] sm:$0xff]
    %v862 = vld [vmem:[%s9 + $0x178] sm:$0xff]
    %v863 = vld [vmem:[%s9 + $0x180] sm:$0xff]
    %v864 = vld [vmem:[%s9 + $0x188] sm:$0xff]
    %v865 = vld [vmem:[%s9 + $0x190] sm:$0xff]
    %v866 = vld [vmem:[%s9 + $0x198] sm:$0xff]
    %v867 = vld [vmem:[%s9 + $0x1a0] sm:$0xff]
    %v868 = vld [vmem:[%s9 + $0x1a8] sm:$0xff]
    %v869 = vld [vmem:[%s9 + $0x1b0] sm:$0xff]
    %v870 = vld [vmem:[%s9 + $0x1b8] sm:$0xff]
    %v871 = vld [vmem:[%s9 + $0x1c0] sm:$0xff]
    %v872 = vld [vmem:[%s9 + $0x1c8] sm:$0xff]
    %v873 = vld [vmem:[%s9 + $0x1d0] sm:$0xff]
    %v874 = vld [vmem:[%s9 + $0x1d8] sm:$0xff]
    %v875 = vld [vmem:[%s9 + $0x1e0] sm:$0xff]
    %v876 = vld [vmem:[%s9 + $0x1e8] sm:$0xff]
    %v877 = vld [vmem:[%s9 + $0x1f0] sm:$0xff]
    %v878 = vld [vmem:[%s9 + $0x1f8] sm:$0xff]
    %v879 = vld [vmem:[%s9 + $0x200] sm:$0xff]
    %v880 = vld [vmem:[%s9 + $0x208] sm:$0xff]
    %v881 = vld [vmem:[%s9 + $0x210] sm:$0xff]
    %v882 = vld [vmem:[%s9 + $0x218] sm:$0xff]
    %v883 = vld [vmem:[%s9 + $0x220] sm:$0xff]
    %v884 = vld [vmem:[%s9 + $0x228] sm:$0xff]
    %v885 = vld [vmem:[%s9 + $0x230] sm:$0xff]
    %v886 = vld [vmem:[%s9 + $0x238] sm:$0xff]
    %v887 = vld [vmem:[%s9 + $0x240] sm:$0xff]
    %v888 = vld [vmem:[%s9 + $0x248] sm:$0xff]
    %v889 = vld [vmem:[%s9 + $0x250] sm:$0xff]
    %v890 = vld [vmem:[%s9 + $0x258] sm:$0xff]
    %v891 = vld [vmem:[%s9 + $0x260] sm:$0xff]
    %v892 = vld [vmem:[%s9 + $0x268] sm:$0xff]
    %v893 = vld [vmem:[%s9 + $0x270] sm:$0xff]
    %v894 = vld [vmem:[%s9 + $0x278] sm:$0xff]
    %v895 = vld [vmem:[%s9 + $0x280] sm:$0xff]
    %v896 = vld [vmem:[%s9 + $0x288] sm:$0xff]
    %v897 = vld [vmem:[%s9 + $0x290] sm:$0xff]
    %v898 = vld [vmem:[%s9 + $0x298] sm:$0xff]
    %v899 = vld [vmem:[%s9 + $0x2a0] sm:$0xff]
    %v900 = vld [vmem:[%s9 + $0x2a8] sm:$0xff]
    %v901 = vld [vmem:[%s9 + $0x2b0] sm:$0xff]
    %v902 = vld [vmem:[%s9 + $0x2b8] sm:$0xff]
    %v903 = vld [vmem:[%s9 + $0x2c0] sm:$0xff]
    %v904 = vld [vmem:[%s9 + $0x2c8] sm:$0xff]
    %v905 = vld [vmem:[%s9 + $0x2d0] sm:$0xff]
    %v906 = vld [vmem:[%s9 + $0x2d8] sm:$0xff]
    %v907 = vld [vmem:[%s9 + $0x2e0] sm:$0xff]
    %v908 = vld [vmem:[%s9 + $0x2e8] sm:$0xff]
    %v909 = vld [vmem:[%s9 + $0x2f0] sm:$0xff]
    %v910 = vld [vmem:[%s9 + $0x2f8] sm:$0xff]
    %v911 = vld [vmem:[%s9 + $0x300] sm:$0xff]
    %v912 = vld [vmem:[%s9 + $0x308] sm:$0xff]
    %v913 = vld [vmem:[%s9 + $0x310] sm:$0xff]
    %v914 = vld [vmem:[%s9 + $0x318] sm:$0xff]
    %v915 = vld [vmem:[%s9 + $0x320] sm:$0xff]
    %v916 = vld [vmem:[%s9 + $0x328] sm:$0xff]
    %v917 = vld [vmem:[%s9 + $0x330] sm:$0xff]
    %v918 = vld [vmem:[%s9 + $0x338] sm:$0xff]
    %v919 = vld [vmem:[%s9 + $0x340] sm:$0xff]
    %v920 = vld [vmem:[%s9 + $0x348] sm:$0xff]
    %v921 = vld [vmem:[%s9 + $0x350] sm:$0xff]
    %v922 = vld [vmem:[%s9 + $0x358] sm:$0xff]
    %v923 = vld [vmem:[%s9 + $0x360] sm:$0xff]
    %v924 = vld [vmem:[%s9 + $0x368] sm:$0xff]
    %v925 = vld [vmem:[%s9 + $0x370] sm:$0xff]
    %v926 = vld [vmem:[%s9 + $0x378] sm:$0xff]
    %v927 = vld [vmem:[%s9 + $0x380] sm:$0xff]
    %v928 = vld [vmem:[%s9 + $0x388] sm:$0xff]
    %v929 = vld [vmem:[%s9 + $0x390] sm:$0xff]
    %v930 = vld [vmem:[%s9 + $0x398] sm:$0xff]
    %v931 = vld [vmem:[%s9 + $0x3a0] sm:$0xff]
    %v932 = vld [vmem:[%s9 + $0x3a8] sm:$0xff]
    %v933 = vld [vmem:[%s9 + $0x3b0] sm:$0xff]
    %v934 = vld [vmem:[%s9 + $0x3b8] sm:$0xff]
    %v935 = vld [vmem:[%s9 + $0x3c0] sm:$0xff]
    %v936 = vld [vmem:[%s9 + $0x3c8] sm:$0xff]
    %v937 = vld [vmem:[%s9 + $0x3d0] sm:$0xff]
    %v938 = vld [vmem:[%s9 + $0x3d8] sm:$0xff]
    %v939 = vld [vmem:[%s9 + $0x3e0] sm:$0xff]
    %v940 = vld [vmem:[%s9 + $0x3e8] sm:$0xff]
    %v941 = vld [vmem:[%s9 + $0x3f0] sm:$0xff]
    %v942 = vld [vmem:[%s9 + $0x3f8] sm:$0xff]
    %943 = vmatprep.subr.mxu0 %v816
    %944 = vmatpush1.msra.mxu0 %v815
    %945 = vmatprep.subr.mxu0 %v818
    %946 = vmatpush1.msra.mxu0 %v817
    %947 = vmatprep.subr.mxu0 %v820
    %948 = vmatpush1.msra.mxu0 %v819
    %949 = vmatprep.subr.mxu0 %v822
    %950 = vmatpush1.msra.mxu0 %v821
    %951 = vmatprep.subr.mxu0 %v824
    %952 = vmatpush1.msra.mxu0 %v823
    %953 = vmatprep.subr.mxu0 %v826
    %954 = vmatpush1.msra.mxu0 %v825
    %955 = vmatprep.subr.mxu0 %v828
    %956 = vmatpush1.msra.mxu0 %v827
    %957 = vmatprep.subr.mxu0 %v830
    %958 = vmatpush1.msra.mxu0 %v829
    %959 = vmatprep.subr.mxu0 %v832
    %960 = vmatpush1.msra.mxu0 %v831
    %961 = vmatprep.subr.mxu0 %v834
    %962 = vmatpush1.msra.mxu0 %v833
    %963 = vmatprep.subr.mxu0 %v836
    %964 = vmatpush1.msra.mxu0 %v835
    %965 = vmatprep.subr.mxu0 %v838
    %966 = vmatpush1.msra.mxu0 %v837
    %967 = vmatprep.subr.mxu0 %v840
    %968 = vmatpush1.msra.mxu0 %v839
    %969 = vmatprep.subr.mxu0 %v842
    %970 = vmatpush1.msra.mxu0 %v841
    %971 = vmatprep.subr.mxu0 %v844
    %972 = vmatpush1.msra.mxu0 %v843
    %973 = vmatprep.subr.mxu0 %v846
    %974 = vmatpush1.msra.mxu0 %v845
    %975 = vmatprep.subr.mxu0 %v848
    %976 = vmatpush1.msra.mxu0 %v847
    %977 = vmatprep.subr.mxu0 %v850
    %978 = vmatpush1.msra.mxu0 %v849
    %979 = vmatprep.subr.mxu0 %v852
    %980 = vmatpush1.msra.mxu0 %v851
    %981 = vmatprep.subr.mxu0 %v854
    %982 = vmatpush1.msra.mxu0 %v853
    %983 = vmatprep.subr.mxu0 %v856
    %984 = vmatpush1.msra.mxu0 %v855
    %985 = vmatprep.subr.mxu0 %v858
    %986 = vmatpush1.msra.mxu0 %v857
    %987 = vmatprep.subr.mxu0 %v860
    %988 = vmatpush1.msra.mxu0 %v859
    %989 = vmatprep.subr.mxu0 %v862
    %990 = vmatpush1.msra.mxu0 %v861
    %991 = vmatprep.subr.mxu0 %v864
    %992 = vmatpush1.msra.mxu0 %v863
    %993 = vmatprep.subr.mxu0 %v866
    %994 = vmatpush1.msra.mxu0 %v865
    %995 = vmatprep.subr.mxu0 %v868
    %996 = vmatpush1.msra.mxu0 %v867
    %997 = vmatprep.subr.mxu0 %v870
    %998 = vmatpush1.msra.mxu0 %v869
    %999 = vmatprep.subr.mxu0 %v872
    %1000 = vmatpush1.msra.mxu0 %v871
    %1001 = vmatprep.subr.mxu0 %v874
    %1002 = vmatpush1.msra.mxu0 %v873
    %1003 = vmatprep.subr.mxu0 %v876
    %1004 = vmatpush1.msra.mxu0 %v875
    %1005 = vmatprep.subr.mxu0 %v878
    %1006 = vmatpush1.msra.mxu0 %v877
    %1007 = vmatprep.mubr.f32.mxu0 %v744
    %1008 = vmatmul.mubr.f32.gmra.mrb[0].mxu0 %v743
    %v1009 = vpop.f32.mrb[0].mxu0
    %v1010 = vadd.f32 0.0, %v1009
    %v1011 = vpop.f32.mrb[0].mxu0
    %v1012 = vadd.f32 0.0, %v1011
    %1013 = vmatprep.mubr.f32.mxu0 %v748
    %1014 = vmatmul.mubr.f32.gmra.mrb[0].mxu0 %v747
    %v1015 = vpop.f32.mrb[0].mxu0
    %v1016 = vadd.f32 0.0, %v1015
    %v1017 = vpop.f32.mrb[0].mxu0
    %v1018 = vadd.f32 0.0, %v1017
    %1019 = vmatprep.mubr.f32.mxu0 %v752
    %1020 = vmatmul.mubr.f32.gmra.mrb[0].mxu0 %v751
    %v1021 = vpop.f32.mrb[0].mxu0
    %v1022 = vadd.f32 0.0, %v1021
    %v1023 = vpop.f32.mrb[0].mxu0
    %v1024 = vadd.f32 0.0, %v1023
    %1025 = vdwg.mxu0
    %1026 = vmatprep.subr.mxu0 %v880
    %1027 = vmatpush1.msra.mxu0 %v879
    %1028 = vmatprep.subr.mxu0 %v882
    %1029 = vmatpush1.msra.mxu0 %v881
    %1030 = vmatprep.subr.mxu0 %v884
    %1031 = vmatpush1.msra.mxu0 %v883
    %1032 = vmatprep.subr.mxu0 %v886
    %1033 = vmatpush1.msra.mxu0 %v885
    %1034 = vmatprep.subr.mxu0 %v888
    %1035 = vmatpush1.msra.mxu0 %v887
    %1036 = vmatprep.subr.mxu0 %v890
    %1037 = vmatpush1.msra.mxu0 %v889
    %1038 = vmatprep.subr.mxu0 %v892
    %1039 = vmatpush1.msra.mxu0 %v891
    %1040 = vmatprep.subr.mxu0 %v894
    %1041 = vmatpush1.msra.mxu0 %v893
    %1042 = vmatprep.subr.mxu0 %v896
    %1043 = vmatpush1.msra.mxu0 %v895
    %1044 = vmatprep.subr.mxu0 %v898
    %1045 = vmatpush1.msra.mxu0 %v897
    %1046 = vmatprep.subr.mxu0 %v900
    %1047 = vmatpush1.msra.mxu0 %v899
    %1048 = vmatprep.subr.mxu0 %v902
    %1049 = vmatpush1.msra.mxu0 %v901
    %1050 = vmatprep.subr.mxu0 %v904
    %1051 = vmatpush1.msra.mxu0 %v903
    %1052 = vmatprep.subr.mxu0 %v906
    %1053 = vmatpush1.msra.mxu0 %v905
    %1054 = vmatprep.subr.mxu0 %v908
    %1055 = vmatpush1.msra.mxu0 %v907
    %1056 = vmatprep.subr.mxu0 %v910
    %1057 = vmatpush1.msra.mxu0 %v909
    %1058 = vmatprep.subr.mxu0 %v912
    %1059 = vmatpush1.msra.mxu0 %v911
    %1060 = vmatprep.subr.mxu0 %v914
    %1061 = vmatpush1.msra.mxu0 %v913
    %1062 = vmatprep.subr.mxu0 %v916
    %1063 = vmatpush1.msra.mxu0 %v915
    %1064 = vmatprep.subr.mxu0 %v918
    %1065 = vmatpush1.msra.mxu0 %v917
    %1066 = vmatprep.subr.mxu0 %v920
    %1067 = vmatpush1.msra.mxu0 %v919
    %1068 = vmatprep.subr.mxu0 %v922
    %1069 = vmatpush1.msra.mxu0 %v921
    %1070 = vmatprep.subr.mxu0 %v924
    %1071 = vmatpush1.msra.mxu0 %v923
    %1072 = vmatprep.subr.mxu0 %v926
    %1073 = vmatpush1.msra.mxu0 %v925
    %1074 = vmatprep.subr.mxu0 %v928
    %1075 = vmatpush1.msra.mxu0 %v927
    %1076 = vmatprep.subr.mxu0 %v930
    %1077 = vmatpush1.msra.mxu0 %v929
    %1078 = vmatprep.subr.mxu0 %v932
    %1079 = vmatpush1.msra.mxu0 %v931
    %1080 = vmatprep.subr.mxu0 %v934
    %1081 = vmatpush1.msra.mxu0 %v933
    %1082 = vmatprep.subr.mxu0 %v936
    %1083 = vmatpush1.msra.mxu0 %v935
    %1084 = vmatprep.subr.mxu0 %v938
    %1085 = vmatpush1.msra.mxu0 %v937
    %1086 = vmatprep.subr.mxu0 %v940
    %1087 = vmatpush1.msra.mxu0 %v939
    %1088 = vmatprep.subr.mxu0 %v942
    %1089 = vmatpush1.msra.mxu0 %v941
    %1090 = vmatprep.mubr.f32.mxu0 %v746
    %1091 = vmatmul.mubr.f32.gmra.mrb[0].mxu0 %v745
    %v1092 = vpop.f32.mrb[0].mxu0
    %v1093 = vadd.f32 %v1010, %v1092
    %v1094 = vpop.f32.mrb[0].mxu0
    %v1095 = vadd.f32 %v1012, %v1094
    %1096 = vmatprep.mubr.f32.mxu0 %v750
    %1097 = vmatmul.mubr.f32.gmra.mrb[0].mxu0 %v749
    %v1098 = vpop.f32.mrb[0].mxu0
    %v1099 = vadd.f32 %v1016, %v1098
    %v1100 = vpop.f32.mrb[0].mxu0
    %v1101 = vadd.f32 %v1018, %v1100
    %1102 = vmatprep.mubr.f32.mxu0 %v754
    %1103 = vmatmul.mubr.f32.gmra.mrb[0].mxu0 %v753
    %v1104 = vpop.f32.mrb[0].mxu0
    %v1105 = vadd.f32 %v1022, %v1104
    %v1106 = vpop.f32.mrb[0].mxu0
    %v1107 = vadd.f32 %v1024, %v1106
    %1108 = vdwg.mxu0
    %v1109 = vld [vmem:[%s10] sm:$0xff]
    %v1110 = vld [vmem:[%s10 + $0x8] sm:$0xff]
    %v1111 = vld [vmem:[%s10 + $0x10] sm:$0xff]
    %v1112 = vld [vmem:[%s10 + $0x18] sm:$0xff]
    %v1113 = vld [vmem:[%s10 + $0x20] sm:$0xff]
    %v1114 = vld [vmem:[%s10 + $0x28] sm:$0xff]
    %v1115 = vmul.f32 %v1093, %v1109
    %v1116 = vmul.f32 %v1095, %v1110
    %v1117 = vmul.f32 %v1099, %v1111
    %v1118 = vmul.f32 %v1101, %v1112
    %v1119 = vmul.f32 %v1105, %v1113
    %v1120 = vmul.f32 %v1107, %v1114
    %v1121 = vld [vmem:[%s8] sm:$0xff]
    %v1122 = vld [vmem:[%s8 + $0x8] sm:$0xff]
    %v1123 = vld [vmem:[%s8 + $0x10] sm:$0xff]
    %v1124 = vld [vmem:[%s8 + $0x18] sm:$0xff]
    %v1125 = vxor.u32 %v1115, 2147483648
    %v1126 = vxor.u32 %v1116, 2147483648
    %v1127 = vxor.u32 %v1117, 2147483648
    %v1128 = vxor.u32 %v1118, 2147483648
    %v1129 = vxor.u32 %v1119, 2147483648
    %v1130 = vxor.u32 %v1120, 2147483648
    %v1131 = vmul.f32 %v1125, 1.442695
    %v1132 = vpow.pop %v1131
    %v1133 = vmul.f32 %v1126, 1.442695
    %v1134 = vpow.pop %v1133
    %v1135 = vmul.f32 %v1127, 1.442695
    %v1136 = vpow.pop %v1135
    %v1137 = vmul.f32 %v1128, 1.442695
    %v1138 = vpow.pop %v1137
    %v1139 = vmul.f32 %v1129, 1.442695
    %v1140 = vpow.pop %v1139
    %v1141 = vmul.f32 %v1130, 1.442695
    %v1142 = vpow.pop %v1141
    %v1143 = vadd.f32 %v1132, 1.0
    %v1144 = vadd.f32 %v1134, 1.0
    %v1145 = vadd.f32 %v1136, 1.0
    %v1146 = vadd.f32 %v1138, 1.0
    %v1147 = vadd.f32 %v1140, 1.0
    %v1148 = vadd.f32 %v1142, 1.0
    %v1149 = vrcp.pop %v1143
    %v1150 = vmul.f32 1.0, %v1149
    %v1151 = vrcp.pop %v1144
    %v1152 = vmul.f32 1.0, %v1151
    %v1153 = vrcp.pop %v1145
    %v1154 = vmul.f32 1.0, %v1153
    %v1155 = vrcp.pop %v1146
    %v1156 = vmul.f32 1.0, %v1155
    %v1157 = vrcp.pop %v1147
    %v1158 = vmul.f32 1.0, %v1157
    %v1159 = vrcp.pop %v1148
    %v1160 = vmul.f32 1.0, %v1159
    %v1161 = vmul.f32 %v1115, %v1150
    %v1162 = vmul.f32 %v1116, %v1152
    %v1163 = vmul.f32 %v1117, %v1154
    %v1164 = vmul.f32 %v1118, %v1156
    %v1165 = vmul.f32 %v1119, %v1158
    %v1166 = vmul.f32 %v1120, %v1160
    %vm1167 = vcmask 195584
    %v1169 = vsel %vm1167, %v1121, 0
    %v1172 = vsel %vm1167, %v1122, 0
    %v1175 = vsel %vm1167, %v1123, 0
    %v1178 = vsel %vm1167, %v1124, 0
    %1180 = vmatprep.subr.mxu0 %v1162
    %1181 = vmatpush1.msra.mxu0 %v1161
    %1182 = vmatprep.subr.mxu0 %v1164
    %1183 = vmatpush1.msra.mxu0 %v1163
    %1184 = vmatprep.subr.mxu0 %v1166
    %1185 = vmatpush1.msra.mxu0 %v1165
    %1186 = vmatprep.subr.mxu0 0.0
    %1187 = vmatpush1.msra.mxu0 0.0
    %1188 = vmatprep.subr.mxu0 0.0
    %1189 = vmatpush1.msra.mxu0 0.0
    %1190 = vmatprep.subr.mxu0 0.0
    %1191 = vmatpush1.msra.mxu0 0.0
    %1192 = vmatprep.subr.mxu0 0.0
    %1193 = vmatpush1.msra.mxu0 0.0
    %1194 = vmatprep.subr.mxu0 0.0
    %1195 = vmatpush1.msra.mxu0 0.0
    %1196 = vmatprep.subr.mxu0 0.0
    %1197 = vmatpush1.msra.mxu0 0.0
    %1198 = vmatprep.subr.mxu0 0.0
    %1199 = vmatpush1.msra.mxu0 0.0
    %1200 = vmatprep.subr.mxu0 0.0
    %1201 = vmatpush1.msra.mxu0 0.0
    %1202 = vmatprep.subr.mxu0 0.0
    %1203 = vmatpush1.msra.mxu0 0.0
    %1204 = vmatprep.subr.mxu0 0.0
    %1205 = vmatpush1.msra.mxu0 0.0
    %1206 = vmatprep.subr.mxu0 0.0
    %1207 = vmatpush1.msra.mxu0 0.0
    %1208 = vmatprep.subr.mxu0 0.0
    %1209 = vmatpush1.msra.mxu0 0.0
    %1210 = vmatprep.subr.mxu0 0.0
    %1211 = vmatpush1.msra.mxu0 0.0
    %1212 = vmatprep.subr.mxu0 0.0
    %1213 = vmatpush1.msra.mxu0 0.0
    %1214 = vmatprep.subr.mxu0 0.0
    %1215 = vmatpush1.msra.mxu0 0.0
    %1216 = vmatprep.subr.mxu0 0.0
    %1217 = vmatpush1.msra.mxu0 0.0
    %1218 = vmatprep.subr.mxu0 0.0
    %1219 = vmatpush1.msra.mxu0 0.0
    %1220 = vmatprep.subr.mxu0 0.0
    %1221 = vmatpush1.msra.mxu0 0.0
    %1222 = vmatprep.subr.mxu0 0.0
    %1223 = vmatpush1.msra.mxu0 0.0
    %1224 = vmatprep.subr.mxu0 0.0
    %1225 = vmatpush1.msra.mxu0 0.0
    %1226 = vmatprep.subr.mxu0 0.0
    %1227 = vmatpush1.msra.mxu0 0.0
    %1228 = vmatprep.subr.mxu0 0.0
    %1229 = vmatpush1.msra.mxu0 0.0
    %1230 = vmatprep.subr.mxu0 0.0
    %1231 = vmatpush1.msra.mxu0 0.0
    %1232 = vmatprep.subr.mxu0 0.0
    %1233 = vmatpush1.msra.mxu0 0.0
    %1234 = vmatprep.subr.mxu0 0.0
    %1235 = vmatpush1.msra.mxu0 0.0
    %1236 = vmatprep.subr.mxu0 0.0
    %1237 = vmatpush1.msra.mxu0 0.0
    %1238 = vmatprep.subr.mxu0 0.0
    %1239 = vmatpush1.msra.mxu0 0.0
    %1240 = vmatprep.subr.mxu0 0.0
    %1241 = vmatpush1.msra.mxu0 0.0
    %1242 = vmatprep.subr.mxu0 0.0
    %1243 = vmatpush1.msra.mxu0 0.0
    %1244 = vmatprep.mubr.f32.mxu0 0.0
    %1245 = vmatmul.mubr.f32.gmra.mrb[0].mxu0 %v1169
    %v1246 = vpop.f32.mrb[0].mxu0
    %v1247 = vadd.f32 0.0, %v1246
    %v1248 = vpop.f32.mrb[0].mxu0
    %v1249 = vadd.f32 0.0, %v1248
    %1250 = vmatprep.mubr.f32.mxu0 0.0
    %1251 = vmatmul.mubr.f32.gmra.mrb[0].mxu0 %v1172
    %v1252 = vpop.f32.mrb[0].mxu0
    %v1253 = vadd.f32 0.0, %v1252
    %v1254 = vpop.f32.mrb[0].mxu0
    %v1255 = vadd.f32 0.0, %v1254
    %1256 = vmatprep.mubr.f32.mxu0 0.0
    %1257 = vmatmul.mubr.f32.gmra.mrb[0].mxu0 %v1175
    %v1258 = vpop.f32.mrb[0].mxu0
    %v1259 = vadd.f32 0.0, %v1258
    %v1260 = vpop.f32.mrb[0].mxu0
    %v1261 = vadd.f32 0.0, %v1260
    %1262 = vmatprep.mubr.f32.mxu0 0.0
    %1263 = vmatmul.mubr.f32.gmra.mrb[0].mxu0 %v1178
    %v1264 = vpop.f32.mrb[0].mxu0
    %v1265 = vadd.f32 0.0, %v1264
    %v1266 = vpop.f32.mrb[0].mxu0
    %v1267 = vadd.f32 0.0, %v1266
    %1268 = vdwg.mxu0
    %v1269 = vld [vmem:[%s11] sm:$0xff]
    %v1270 = vld [vmem:[%s11 + $0x8] sm:$0xff]
    %v1271 = vld [vmem:[%s11 + $0x10] sm:$0xff]
    %v1272 = vld [vmem:[%s11 + $0x18] sm:$0xff]
    %v1273 = vld [vmem:[%s11 + $0x20] sm:$0xff]
    %v1274 = vld [vmem:[%s11 + $0x28] sm:$0xff]
    %v1275 = vld [vmem:[%s11 + $0x30] sm:$0xff]
    %v1276 = vld [vmem:[%s11 + $0x38] sm:$0xff]
    %v1277 = vld [vmem:[%s11 + $0x40] sm:$0xff]
    %v1278 = vld [vmem:[%s11 + $0x48] sm:$0xff]
    %v1279 = vld [vmem:[%s11 + $0x50] sm:$0xff]
    %v1280 = vld [vmem:[%s11 + $0x58] sm:$0xff]
    %v1281 = vld [vmem:[%s11 + $0x60] sm:$0xff]
    %v1282 = vld [vmem:[%s11 + $0x68] sm:$0xff]
    %v1283 = vld [vmem:[%s11 + $0x70] sm:$0xff]
    %v1284 = vld [vmem:[%s11 + $0x78] sm:$0xff]
    %v1285 = vld [vmem:[%s11 + $0x80] sm:$0xff]
    %v1286 = vld [vmem:[%s11 + $0x88] sm:$0xff]
    %v1287 = vld [vmem:[%s11 + $0x90] sm:$0xff]
    %v1288 = vld [vmem:[%s11 + $0x98] sm:$0xff]
    %v1289 = vld [vmem:[%s11 + $0xa0] sm:$0xff]
    %v1290 = vld [vmem:[%s11 + $0xa8] sm:$0xff]
    %v1291 = vld [vmem:[%s11 + $0xb0] sm:$0xff]
    %v1292 = vld [vmem:[%s11 + $0xb8] sm:$0xff]
    %v1293 = vld [vmem:[%s11 + $0xc0] sm:$0xff]
    %v1294 = vld [vmem:[%s11 + $0xc8] sm:$0xff]
    %v1295 = vld [vmem:[%s11 + $0xd0] sm:$0xff]
    %v1296 = vld [vmem:[%s11 + $0xd8] sm:$0xff]
    %v1297 = vld [vmem:[%s11 + $0xe0] sm:$0xff]
    %v1298 = vld [vmem:[%s11 + $0xe8] sm:$0xff]
    %v1299 = vld [vmem:[%s11 + $0xf0] sm:$0xff]
    %v1300 = vld [vmem:[%s11 + $0xf8] sm:$0xff]
    %v1301 = vld [vmem:[%s11 + $0x100] sm:$0xff]
    %v1302 = vld [vmem:[%s11 + $0x108] sm:$0xff]
    %v1303 = vld [vmem:[%s11 + $0x110] sm:$0xff]
    %v1304 = vld [vmem:[%s11 + $0x118] sm:$0xff]
    %v1305 = vld [vmem:[%s11 + $0x120] sm:$0xff]
    %v1306 = vld [vmem:[%s11 + $0x128] sm:$0xff]
    %v1307 = vld [vmem:[%s11 + $0x130] sm:$0xff]
    %v1308 = vld [vmem:[%s11 + $0x138] sm:$0xff]
    %v1309 = vld [vmem:[%s11 + $0x140] sm:$0xff]
    %v1310 = vld [vmem:[%s11 + $0x148] sm:$0xff]
    %v1311 = vld [vmem:[%s11 + $0x150] sm:$0xff]
    %v1312 = vld [vmem:[%s11 + $0x158] sm:$0xff]
    %v1313 = vld [vmem:[%s11 + $0x160] sm:$0xff]
    %v1314 = vld [vmem:[%s11 + $0x168] sm:$0xff]
    %v1315 = vld [vmem:[%s11 + $0x170] sm:$0xff]
    %v1316 = vld [vmem:[%s11 + $0x178] sm:$0xff]
    %v1317 = vld [vmem:[%s11 + $0x180] sm:$0xff]
    %v1318 = vld [vmem:[%s11 + $0x188] sm:$0xff]
    %v1319 = vld [vmem:[%s11 + $0x190] sm:$0xff]
    %v1320 = vld [vmem:[%s11 + $0x198] sm:$0xff]
    %v1321 = vld [vmem:[%s11 + $0x1a0] sm:$0xff]
    %v1322 = vld [vmem:[%s11 + $0x1a8] sm:$0xff]
    %v1323 = vld [vmem:[%s11 + $0x1b0] sm:$0xff]
    %v1324 = vld [vmem:[%s11 + $0x1b8] sm:$0xff]
    %v1325 = vld [vmem:[%s11 + $0x1c0] sm:$0xff]
    %v1326 = vld [vmem:[%s11 + $0x1c8] sm:$0xff]
    %v1327 = vld [vmem:[%s11 + $0x1d0] sm:$0xff]
    %v1328 = vld [vmem:[%s11 + $0x1d8] sm:$0xff]
    %v1329 = vld [vmem:[%s11 + $0x1e0] sm:$0xff]
    %v1330 = vld [vmem:[%s11 + $0x1e8] sm:$0xff]
    %v1331 = vld [vmem:[%s11 + $0x1f0] sm:$0xff]
    %v1332 = vld [vmem:[%s11 + $0x1f8] sm:$0xff]
    %v1333 = vld [vmem:[%s11 + $0x200] sm:$0xff]
    %v1334 = vld [vmem:[%s11 + $0x208] sm:$0xff]
    %v1335 = vld [vmem:[%s11 + $0x210] sm:$0xff]
    %v1336 = vld [vmem:[%s11 + $0x218] sm:$0xff]
    %v1337 = vld [vmem:[%s11 + $0x220] sm:$0xff]
    %v1338 = vld [vmem:[%s11 + $0x228] sm:$0xff]
    %v1339 = vld [vmem:[%s11 + $0x230] sm:$0xff]
    %v1340 = vld [vmem:[%s11 + $0x238] sm:$0xff]
    %v1341 = vld [vmem:[%s11 + $0x240] sm:$0xff]
    %v1342 = vld [vmem:[%s11 + $0x248] sm:$0xff]
    %v1343 = vld [vmem:[%s11 + $0x250] sm:$0xff]
    %v1344 = vld [vmem:[%s11 + $0x258] sm:$0xff]
    %v1345 = vld [vmem:[%s11 + $0x260] sm:$0xff]
    %v1346 = vld [vmem:[%s11 + $0x268] sm:$0xff]
    %v1347 = vld [vmem:[%s11 + $0x270] sm:$0xff]
    %v1348 = vld [vmem:[%s11 + $0x278] sm:$0xff]
    %v1349 = vld [vmem:[%s11 + $0x280] sm:$0x3]
    %v1350 = vld [vmem:[%s11 + $0x288] sm:$0x3]
    %v1351 = vld [vmem:[%s11 + $0x290] sm:$0x3]
    %v1352 = vld [vmem:[%s11 + $0x298] sm:$0x3]
    %vm1353 = vcmask 277504
    %v1355 = vsel %vm1353, %v1249, 0
    %v1358 = vsel %vm1353, %v1255, 0
    %v1361 = vsel %vm1353, %v1261, 0
    %v1364 = vsel %vm1353, %v1267, 0
    %vm1366 = vcmask 1041408
    %v1368 = vsel %vm1366, %v1349, 0
    %v1371 = vsel %vm1366, %v1350, 0
    %v1374 = vsel %vm1366, %v1351, 0
    %v1377 = vsel %vm1366, %v1352, 0
    %1379 = vmatprep.subr.mxu0 %v1270
    %1380 = vmatpush1.msra.mxu0 %v1269
    %1381 = vmatprep.subr.mxu0 %v1274
    %1382 = vmatpush1.msra.mxu0 %v1273
    %1383 = vmatprep.subr.mxu0 %v1278
    %1384 = vmatpush1.msra.mxu0 %v1277
    %1385 = vmatprep.subr.mxu0 %v1282
    %1386 = vmatpush1.msra.mxu0 %v1281
    %1387 = vmatprep.subr.mxu0 %v1286
    %1388 = vmatpush1.msra.mxu0 %v1285
    %1389 = vmatprep.subr.mxu0 %v1290
    %1390 = vmatpush1.msra.mxu0 %v1289
    %1391 = vmatprep.subr.mxu0 %v1294
    %1392 = vmatpush1.msra.mxu0 %v1293
    %1393 = vmatprep.subr.mxu0 %v1298
    %1394 = vmatpush1.msra.mxu0 %v1297
    %1395 = vmatprep.subr.mxu0 %v1302
    %1396 = vmatpush1.msra.mxu0 %v1301
    %1397 = vmatprep.subr.mxu0 %v1306
    %1398 = vmatpush1.msra.mxu0 %v1305
    %1399 = vmatprep.subr.mxu0 %v1310
    %1400 = vmatpush1.msra.mxu0 %v1309
    %1401 = vmatprep.subr.mxu0 %v1314
    %1402 = vmatpush1.msra.mxu0 %v1313
    %1403 = vmatprep.subr.mxu0 %v1318
    %1404 = vmatpush1.msra.mxu0 %v1317
    %1405 = vmatprep.subr.mxu0 %v1322
    %1406 = vmatpush1.msra.mxu0 %v1321
    %1407 = vmatprep.subr.mxu0 %v1326
    %1408 = vmatpush1.msra.mxu0 %v1325
    %1409 = vmatprep.subr.mxu0 %v1330
    %1410 = vmatpush1.msra.mxu0 %v1329
    %1411 = vmatprep.subr.mxu0 %v1334
    %1412 = vmatpush1.msra.mxu0 %v1333
    %1413 = vmatprep.subr.mxu0 %v1338
    %1414 = vmatpush1.msra.mxu0 %v1337
    %1415 = vmatprep.subr.mxu0 %v1342
    %1416 = vmatpush1.msra.mxu0 %v1341
    %1417 = vmatprep.subr.mxu0 %v1346
    %1418 = vmatpush1.msra.mxu0 %v1345
    %1419 = vmatprep.subr.mxu0 %v1371
    %1420 = vmatpush1.msra.mxu0 %v1368
    %1421 = vmatprep.subr.mxu0 0.0
    %1422 = vmatpush1.msra.mxu0 0.0
    %1423 = vmatprep.subr.mxu0 0.0
    %1424 = vmatpush1.msra.mxu0 0.0
    %1425 = vmatprep.subr.mxu0 0.0
    %1426 = vmatpush1.msra.mxu0 0.0
    %1427 = vmatprep.subr.mxu0 0.0
    %1428 = vmatpush1.msra.mxu0 0.0
    %1429 = vmatprep.subr.mxu0 0.0
    %1430 = vmatpush1.msra.mxu0 0.0
    %1431 = vmatprep.subr.mxu0 0.0
    %1432 = vmatpush1.msra.mxu0 0.0
    %1433 = vmatprep.subr.mxu0 0.0
    %1434 = vmatpush1.msra.mxu0 0.0
    %1435 = vmatprep.subr.mxu0 0.0
    %1436 = vmatpush1.msra.mxu0 0.0
    %1437 = vmatprep.subr.mxu0 0.0
    %1438 = vmatpush1.msra.mxu0 0.0
    %1439 = vmatprep.subr.mxu0 0.0
    %1440 = vmatpush1.msra.mxu0 0.0
    %1441 = vmatprep.subr.mxu0 0.0
    %1442 = vmatpush1.msra.mxu0 0.0
    %1443 = vmatprep.mubr.f32.mxu0 %v1355
    %1444 = vmatmul.mubr.f32.gmra.mrb[0].mxu0 %v1247
    %v1445 = vpop.f32.mrb[0].mxu0
    %v1446 = vadd.f32 0.0, %v1445
    %v1447 = vpop.f32.mrb[0].mxu0
    %v1448 = vadd.f32 0.0, %v1447
    %1449 = vmatprep.mubr.f32.mxu0 %v1358
    %1450 = vmatmul.mubr.f32.gmra.mrb[0].mxu0 %v1253
    %v1451 = vpop.f32.mrb[0].mxu0
    %v1452 = vadd.f32 0.0, %v1451
    %v1453 = vpop.f32.mrb[0].mxu0
    %v1454 = vadd.f32 0.0, %v1453
    %1455 = vmatprep.mubr.f32.mxu0 %v1361
    %1456 = vmatmul.mubr.f32.gmra.mrb[0].mxu0 %v1259
    %v1457 = vpop.f32.mrb[0].mxu0
    %v1458 = vadd.f32 0.0, %v1457
    %v1459 = vpop.f32.mrb[0].mxu0
    %v1460 = vadd.f32 0.0, %v1459
    %1461 = vmatprep.mubr.f32.mxu0 %v1364
    %1462 = vmatmul.mubr.f32.gmra.mrb[0].mxu0 %v1265
    %v1463 = vpop.f32.mrb[0].mxu0
    %v1464 = vadd.f32 0.0, %v1463
    %v1465 = vpop.f32.mrb[0].mxu0
    %v1466 = vadd.f32 0.0, %v1465
    %1467 = vdwg.mxu0
    %1468 = vmatprep.subr.mxu0 %v1272
    %1469 = vmatpush1.msra.mxu0 %v1271
    %1470 = vmatprep.subr.mxu0 %v1276
    %1471 = vmatpush1.msra.mxu0 %v1275
    %1472 = vmatprep.subr.mxu0 %v1280
    %1473 = vmatpush1.msra.mxu0 %v1279
    %1474 = vmatprep.subr.mxu0 %v1284
    %1475 = vmatpush1.msra.mxu0 %v1283
    %1476 = vmatprep.subr.mxu0 %v1288
    %1477 = vmatpush1.msra.mxu0 %v1287
    %1478 = vmatprep.subr.mxu0 %v1292
    %1479 = vmatpush1.msra.mxu0 %v1291
    %1480 = vmatprep.subr.mxu0 %v1296
    %1481 = vmatpush1.msra.mxu0 %v1295
    %1482 = vmatprep.subr.mxu0 %v1300
    %1483 = vmatpush1.msra.mxu0 %v1299
    %1484 = vmatprep.subr.mxu0 %v1304
    %1485 = vmatpush1.msra.mxu0 %v1303
    %1486 = vmatprep.subr.mxu0 %v1308
    %1487 = vmatpush1.msra.mxu0 %v1307
    %1488 = vmatprep.subr.mxu0 %v1312
    %1489 = vmatpush1.msra.mxu0 %v1311
    %1490 = vmatprep.subr.mxu0 %v1316
    %1491 = vmatpush1.msra.mxu0 %v1315
    %1492 = vmatprep.subr.mxu0 %v1320
    %1493 = vmatpush1.msra.mxu0 %v1319
    %1494 = vmatprep.subr.mxu0 %v1324
    %1495 = vmatpush1.msra.mxu0 %v1323
    %1496 = vmatprep.subr.mxu0 %v1328
    %1497 = vmatpush1.msra.mxu0 %v1327
    %1498 = vmatprep.subr.mxu0 %v1332
    %1499 = vmatpush1.msra.mxu0 %v1331
    %1500 = vmatprep.subr.mxu0 %v1336
    %1501 = vmatpush1.msra.mxu0 %v1335
    %1502 = vmatprep.subr.mxu0 %v1340
    %1503 = vmatpush1.msra.mxu0 %v1339
    %1504 = vmatprep.subr.mxu0 %v1344
    %1505 = vmatpush1.msra.mxu0 %v1343
    %1506 = vmatprep.subr.mxu0 %v1348
    %1507 = vmatpush1.msra.mxu0 %v1347
    %1508 = vmatprep.subr.mxu0 %v1377
    %1509 = vmatpush1.msra.mxu0 %v1374
    %1510 = vmatprep.subr.mxu0 0.0
    %1511 = vmatpush1.msra.mxu0 0.0
    %1512 = vmatprep.subr.mxu0 0.0
    %1513 = vmatpush1.msra.mxu0 0.0
    %1514 = vmatprep.subr.mxu0 0.0
    %1515 = vmatpush1.msra.mxu0 0.0
    %1516 = vmatprep.subr.mxu0 0.0
    %1517 = vmatpush1.msra.mxu0 0.0
    %1518 = vmatprep.subr.mxu0 0.0
    %1519 = vmatpush1.msra.mxu0 0.0
    %1520 = vmatprep.subr.mxu0 0.0
    %1521 = vmatpush1.msra.mxu0 0.0
    %1522 = vmatprep.subr.mxu0 0.0
    %1523 = vmatpush1.msra.mxu0 0.0
    %1524 = vmatprep.subr.mxu0 0.0
    %1525 = vmatpush1.msra.mxu0 0.0
    %1526 = vmatprep.subr.mxu0 0.0
    %1527 = vmatpush1.msra.mxu0 0.0
    %1528 = vmatprep.subr.mxu0 0.0
    %1529 = vmatpush1.msra.mxu0 0.0
    %1530 = vmatprep.subr.mxu0 0.0
    %1531 = vmatpush1.msra.mxu0 0.0
    %1532 = vmatprep.mubr.f32.mxu0 %v1355
    %1533 = vmatmul.mubr.f32.gmra.mrb[0].mxu0 %v1247
    %v1534 = vpop.f32.mrb[0].mxu0
    %v1535 = vadd.f32 0.0, %v1534
    %v1536 = vpop.f32.mrb[0].mxu0
    %v1537 = vadd.f32 0.0, %v1536
    %1538 = vmatprep.mubr.f32.mxu0 %v1358
    %1539 = vmatmul.mubr.f32.gmra.mrb[0].mxu0 %v1253
    %v1540 = vpop.f32.mrb[0].mxu0
    %v1541 = vadd.f32 0.0, %v1540
    %v1542 = vpop.f32.mrb[0].mxu0
    %v1543 = vadd.f32 0.0, %v1542
    %1544 = vmatprep.mubr.f32.mxu0 %v1361
    %1545 = vmatmul.mubr.f32.gmra.mrb[0].mxu0 %v1259
    %v1546 = vpop.f32.mrb[0].mxu0
    %v1547 = vadd.f32 0.0, %v1546
    %v1548 = vpop.f32.mrb[0].mxu0
    %v1549 = vadd.f32 0.0, %v1548
    %1550 = vmatprep.mubr.f32.mxu0 %v1364
    %1551 = vmatmul.mubr.f32.gmra.mrb[0].mxu0 %v1265
    %v1552 = vpop.f32.mrb[0].mxu0
    %v1553 = vadd.f32 0.0, %v1552
    %v1554 = vpop.f32.mrb[0].mxu0
    %v1555 = vadd.f32 0.0, %v1554
    %1556 = vdwg.mxu0
    %vm1557 = vcmask 130048
    %v1559 = vsel %vm1557, %v755, 0
    %v1562 = vsel %vm1557, %v756, 0
    %v1565 = vsel %vm1557, %v757, 0
    %v1568 = vsel %vm1557, %v758, 0
    %1570 = vmatprep.subr.mxu0 %v808
    %1571 = vmatpush1.msra.mxu0 %v807
    %1572 = vmatprep.subr.mxu0 %v812
    %1573 = vmatpush1.msra.mxu0 %v811
    %1574 = vmatprep.subr.mxu0 0.0
    %1575 = vmatpush1.msra.mxu0 0.0
    %1576 = vmatprep.subr.mxu0 0.0
    %1577 = vmatpush1.msra.mxu0 0.0
    %1578 = vmatprep.subr.mxu0 0.0
    %1579 = vmatpush1.msra.mxu0 0.0
    %1580 = vmatprep.subr.mxu0 0.0
    %1581 = vmatpush1.msra.mxu0 0.0
    %1582 = vmatprep.subr.mxu0 0.0
    %1583 = vmatpush1.msra.mxu0 0.0
    %1584 = vmatprep.subr.mxu0 0.0
    %1585 = vmatpush1.msra.mxu0 0.0
    %1586 = vmatprep.subr.mxu0 0.0
    %1587 = vmatpush1.msra.mxu0 0.0
    %1588 = vmatprep.subr.mxu0 0.0
    %1589 = vmatpush1.msra.mxu0 0.0
    %1590 = vmatprep.subr.mxu0 0.0
    %1591 = vmatpush1.msra.mxu0 0.0
    %1592 = vmatprep.subr.mxu0 0.0
    %1593 = vmatpush1.msra.mxu0 0.0
    %1594 = vmatprep.subr.mxu0 0.0
    %1595 = vmatpush1.msra.mxu0 0.0
    %1596 = vmatprep.subr.mxu0 0.0
    %1597 = vmatpush1.msra.mxu0 0.0
    %1598 = vmatprep.subr.mxu0 0.0
    %1599 = vmatpush1.msra.mxu0 0.0
    %1600 = vmatprep.subr.mxu0 0.0
    %1601 = vmatpush1.msra.mxu0 0.0
    %1602 = vmatprep.subr.mxu0 0.0
    %1603 = vmatpush1.msra.mxu0 0.0
    %1604 = vmatprep.subr.mxu0 0.0
    %1605 = vmatpush1.msra.mxu0 0.0
    %1606 = vmatprep.subr.mxu0 0.0
    %1607 = vmatpush1.msra.mxu0 0.0
    %1608 = vmatprep.subr.mxu0 0.0
    %1609 = vmatpush1.msra.mxu0 0.0
    %1610 = vmatprep.subr.mxu0 0.0
    %1611 = vmatpush1.msra.mxu0 0.0
    %1612 = vmatprep.subr.mxu0 0.0
    %1613 = vmatpush1.msra.mxu0 0.0
    %1614 = vmatprep.subr.mxu0 0.0
    %1615 = vmatpush1.msra.mxu0 0.0
    %1616 = vmatprep.subr.mxu0 0.0
    %1617 = vmatpush1.msra.mxu0 0.0
    %1618 = vmatprep.subr.mxu0 0.0
    %1619 = vmatpush1.msra.mxu0 0.0
    %1620 = vmatprep.subr.mxu0 0.0
    %1621 = vmatpush1.msra.mxu0 0.0
    %1622 = vmatprep.subr.mxu0 0.0
    %1623 = vmatpush1.msra.mxu0 0.0
    %1624 = vmatprep.subr.mxu0 0.0
    %1625 = vmatpush1.msra.mxu0 0.0
    %1626 = vmatprep.subr.mxu0 0.0
    %1627 = vmatpush1.msra.mxu0 0.0
    %1628 = vmatprep.subr.mxu0 0.0
    %1629 = vmatpush1.msra.mxu0 0.0
    %1630 = vmatprep.subr.mxu0 0.0
    %1631 = vmatpush1.msra.mxu0 0.0
    %1632 = vmatprep.subr.mxu0 0.0
    %1633 = vmatpush1.msra.mxu0 0.0
    %1634 = vmatprep.mubr.f32.mxu0 0.0
    %1635 = vmatmul.mubr.f32.gmra.mrb[0].mxu0 %v1559
    %v1636 = vpop.f32.mrb[0].mxu0
    %v1637 = vadd.f32 %v1446, %v1636
    %v1638 = vpop.f32.mrb[0].mxu0
    %v1639 = vadd.f32 %v1448, %v1638
    %1640 = vmatprep.mubr.f32.mxu0 0.0
    %1641 = vmatmul.mubr.f32.gmra.mrb[0].mxu0 %v1562
    %v1642 = vpop.f32.mrb[0].mxu0
    %v1643 = vadd.f32 %v1452, %v1642
    %v1644 = vpop.f32.mrb[0].mxu0
    %v1645 = vadd.f32 %v1454, %v1644
    %1646 = vmatprep.mubr.f32.mxu0 0.0
    %1647 = vmatmul.mubr.f32.gmra.mrb[0].mxu0 %v1565
    %v1648 = vpop.f32.mrb[0].mxu0
    %v1649 = vadd.f32 %v1458, %v1648
    %v1650 = vpop.f32.mrb[0].mxu0
    %v1651 = vadd.f32 %v1460, %v1650
    %1652 = vmatprep.mubr.f32.mxu0 0.0
    %1653 = vmatmul.mubr.f32.gmra.mrb[0].mxu0 %v1568
    %v1654 = vpop.f32.mrb[0].mxu0
    %v1655 = vadd.f32 %v1464, %v1654
    %v1656 = vpop.f32.mrb[0].mxu0
    %v1657 = vadd.f32 %v1466, %v1656
    %1658 = vdwg.mxu0
    %1659 = vmatprep.subr.mxu0 %v810
    %1660 = vmatpush1.msra.mxu0 %v809
    %1661 = vmatprep.subr.mxu0 %v814
    %1662 = vmatpush1.msra.mxu0 %v813
    %1663 = vmatprep.subr.mxu0 0.0
    %1664 = vmatpush1.msra.mxu0 0.0
    %1665 = vmatprep.subr.mxu0 0.0
    %1666 = vmatpush1.msra.mxu0 0.0
    %1667 = vmatprep.subr.mxu0 0.0
    %1668 = vmatpush1.msra.mxu0 0.0
    %1669 = vmatprep.subr.mxu0 0.0
    %1670 = vmatpush1.msra.mxu0 0.0
    %1671 = vmatprep.subr.mxu0 0.0
    %1672 = vmatpush1.msra.mxu0 0.0
    %1673 = vmatprep.subr.mxu0 0.0
    %1674 = vmatpush1.msra.mxu0 0.0
    %1675 = vmatprep.subr.mxu0 0.0
    %1676 = vmatpush1.msra.mxu0 0.0
    %1677 = vmatprep.subr.mxu0 0.0
    %1678 = vmatpush1.msra.mxu0 0.0
    %1679 = vmatprep.subr.mxu0 0.0
    %1680 = vmatpush1.msra.mxu0 0.0
    %1681 = vmatprep.subr.mxu0 0.0
    %1682 = vmatpush1.msra.mxu0 0.0
    %1683 = vmatprep.subr.mxu0 0.0
    %1684 = vmatpush1.msra.mxu0 0.0
    %1685 = vmatprep.subr.mxu0 0.0
    %1686 = vmatpush1.msra.mxu0 0.0
    %1687 = vmatprep.subr.mxu0 0.0
    %1688 = vmatpush1.msra.mxu0 0.0
    %1689 = vmatprep.subr.mxu0 0.0
    %1690 = vmatpush1.msra.mxu0 0.0
    %1691 = vmatprep.subr.mxu0 0.0
    %1692 = vmatpush1.msra.mxu0 0.0
    %1693 = vmatprep.subr.mxu0 0.0
    %1694 = vmatpush1.msra.mxu0 0.0
    %1695 = vmatprep.subr.mxu0 0.0
    %1696 = vmatpush1.msra.mxu0 0.0
    %1697 = vmatprep.subr.mxu0 0.0
    %1698 = vmatpush1.msra.mxu0 0.0
    %1699 = vmatprep.subr.mxu0 0.0
    %1700 = vmatpush1.msra.mxu0 0.0
    %1701 = vmatprep.subr.mxu0 0.0
    %1702 = vmatpush1.msra.mxu0 0.0
    %1703 = vmatprep.subr.mxu0 0.0
    %1704 = vmatpush1.msra.mxu0 0.0
    %1705 = vmatprep.subr.mxu0 0.0
    %1706 = vmatpush1.msra.mxu0 0.0
    %1707 = vmatprep.subr.mxu0 0.0
    %1708 = vmatpush1.msra.mxu0 0.0
    %1709 = vmatprep.subr.mxu0 0.0
    %1710 = vmatpush1.msra.mxu0 0.0
    %1711 = vmatprep.subr.mxu0 0.0
    %1712 = vmatpush1.msra.mxu0 0.0
    %1713 = vmatprep.subr.mxu0 0.0
    %1714 = vmatpush1.msra.mxu0 0.0
    %1715 = vmatprep.subr.mxu0 0.0
    %1716 = vmatpush1.msra.mxu0 0.0
    %1717 = vmatprep.subr.mxu0 0.0
    %1718 = vmatpush1.msra.mxu0 0.0
    %1719 = vmatprep.subr.mxu0 0.0
    %1720 = vmatpush1.msra.mxu0 0.0
    %1721 = vmatprep.subr.mxu0 0.0
    %1722 = vmatpush1.msra.mxu0 0.0
    %1723 = vmatprep.mubr.f32.mxu0 0.0
    %1724 = vmatmul.mubr.f32.gmra.mrb[0].mxu0 %v1559
    %v1725 = vpop.f32.mrb[0].mxu0
    %v1726 = vadd.f32 %v1535, %v1725
    %v1727 = vpop.f32.mrb[0].mxu0
    %v1728 = vadd.f32 %v1537, %v1727
    %1729 = vmatprep.mubr.f32.mxu0 0.0
    %1730 = vmatmul.mubr.f32.gmra.mrb[0].mxu0 %v1562
    %v1731 = vpop.f32.mrb[0].mxu0
    %v1732 = vadd.f32 %v1541, %v1731
    %v1733 = vpop.f32.mrb[0].mxu0
    %v1734 = vadd.f32 %v1543, %v1733
    %1735 = vmatprep.mubr.f32.mxu0 0.0
    %1736 = vmatmul.mubr.f32.gmra.mrb[0].mxu0 %v1565
    %v1737 = vpop.f32.mrb[0].mxu0
    %v1738 = vadd.f32 %v1547, %v1737
    %v1739 = vpop.f32.mrb[0].mxu0
    %v1740 = vadd.f32 %v1549, %v1739
    %1741 = vmatprep.mubr.f32.mxu0 0.0
    %1742 = vmatmul.mubr.f32.gmra.mrb[0].mxu0 %v1568
    %v1743 = vpop.f32.mrb[0].mxu0
    %v1744 = vadd.f32 %v1553, %v1743
    %v1745 = vpop.f32.mrb[0].mxu0
    %v1746 = vadd.f32 %v1555, %v1745
    %1747 = vdwg.mxu0
    %v1748 = vld [vmem:[%s12] sm:$0xff]
    %v1749 = vld [vmem:[%s12 + $0x8] sm:$0xff]
    %v1750 = vld [vmem:[%s12 + $0x10] sm:$0xff]
    %v1751 = vld [vmem:[%s12 + $0x18] sm:$0xff]
    %1753 = vset.pattern.permute.xlu0 0
    %1754 = vperm.xlu0 %1753, %v1748
    %v1755 = vpop.permute.xlu0 %1754
    %1758 = vset.pattern.permute.xlu0 0
    %1759 = vperm.xlu0 %1758, %v1749
    %v1760 = vpop.permute.xlu0 %1759
    %1763 = vset.pattern.permute.xlu0 0
    %1764 = vperm.xlu0 %1763, %v1750
    %v1765 = vpop.permute.xlu0 %1764
    %1768 = vset.pattern.permute.xlu0 0
    %1769 = vperm.xlu0 %1768, %v1751
    %v1770 = vpop.permute.xlu0 %1769
    %v1772 = vadd.f32 %v1637, %v1755
    %v1773 = vadd.f32 %v1639, %v1755
    %v1774 = vadd.f32 %v1726, %v1755
    %v1775 = vadd.f32 %v1728, %v1755
    %v1776 = vadd.f32 %v1643, %v1760
    %v1777 = vadd.f32 %v1645, %v1760
    %v1778 = vadd.f32 %v1732, %v1760
    %v1779 = vadd.f32 %v1734, %v1760
    %v1780 = vadd.f32 %v1649, %v1765
    %v1781 = vadd.f32 %v1651, %v1765
    %v1782 = vadd.f32 %v1738, %v1765
    %v1783 = vadd.f32 %v1740, %v1765
    %v1784 = vadd.f32 %v1655, %v1770
    %v1785 = vadd.f32 %v1657, %v1770
    %v1786 = vadd.f32 %v1744, %v1770
    %v1787 = vadd.f32 %v1746, %v1770
    %v1788 = vxor.u32 %v1772, 2147483648
    %v1789 = vxor.u32 %v1773, 2147483648
    %v1790 = vxor.u32 %v1774, 2147483648
    %v1791 = vxor.u32 %v1775, 2147483648
    %v1792 = vxor.u32 %v1776, 2147483648
    %v1793 = vxor.u32 %v1777, 2147483648
    %v1794 = vxor.u32 %v1778, 2147483648
    %v1795 = vxor.u32 %v1779, 2147483648
    %v1796 = vxor.u32 %v1780, 2147483648
    %v1797 = vxor.u32 %v1781, 2147483648
    %v1798 = vxor.u32 %v1782, 2147483648
    %v1799 = vxor.u32 %v1783, 2147483648
    %v1800 = vxor.u32 %v1784, 2147483648
    %v1801 = vxor.u32 %v1785, 2147483648
    %v1802 = vxor.u32 %v1786, 2147483648
    %v1803 = vxor.u32 %v1787, 2147483648
    %v1804 = vmul.f32 %v1788, 1.442695
    %v1805 = vpow.pop %v1804
    %v1806 = vmul.f32 %v1789, 1.442695
    %v1807 = vpow.pop %v1806
    %v1808 = vmul.f32 %v1790, 1.442695
    %v1809 = vpow.pop %v1808
    %v1810 = vmul.f32 %v1791, 1.442695
    %v1811 = vpow.pop %v1810
    %v1812 = vmul.f32 %v1792, 1.442695
    %v1813 = vpow.pop %v1812
    %v1814 = vmul.f32 %v1793, 1.442695
    %v1815 = vpow.pop %v1814
    %v1816 = vmul.f32 %v1794, 1.442695
    %v1817 = vpow.pop %v1816
    %v1818 = vmul.f32 %v1795, 1.442695
    %v1819 = vpow.pop %v1818
    %v1820 = vmul.f32 %v1796, 1.442695
    %v1821 = vpow.pop %v1820
    %v1822 = vmul.f32 %v1797, 1.442695
    %v1823 = vpow.pop %v1822
    %v1824 = vmul.f32 %v1798, 1.442695
    %v1825 = vpow.pop %v1824
    %v1826 = vmul.f32 %v1799, 1.442695
    %v1827 = vpow.pop %v1826
    %v1828 = vmul.f32 %v1800, 1.442695
    %v1829 = vpow.pop %v1828
    %v1830 = vmul.f32 %v1801, 1.442695
    %v1831 = vpow.pop %v1830
    %v1832 = vmul.f32 %v1802, 1.442695
    %v1833 = vpow.pop %v1832
    %v1834 = vmul.f32 %v1803, 1.442695
    %v1835 = vpow.pop %v1834
    %v1836 = vadd.f32 %v1805, 1.0
    %v1837 = vadd.f32 %v1807, 1.0
    %v1838 = vadd.f32 %v1809, 1.0
    %v1839 = vadd.f32 %v1811, 1.0
    %v1840 = vadd.f32 %v1813, 1.0
    %v1841 = vadd.f32 %v1815, 1.0
    %v1842 = vadd.f32 %v1817, 1.0
    %v1843 = vadd.f32 %v1819, 1.0
    %v1844 = vadd.f32 %v1821, 1.0
    %v1845 = vadd.f32 %v1823, 1.0
    %v1846 = vadd.f32 %v1825, 1.0
    %v1847 = vadd.f32 %v1827, 1.0
    %v1848 = vadd.f32 %v1829, 1.0
    %v1849 = vadd.f32 %v1831, 1.0
    %v1850 = vadd.f32 %v1833, 1.0
    %v1851 = vadd.f32 %v1835, 1.0
    %v1852 = vrcp.pop %v1836
    %v1853 = vmul.f32 1.0, %v1852
    %v1854 = vrcp.pop %v1837
    %v1855 = vmul.f32 1.0, %v1854
    %v1856 = vrcp.pop %v1838
    %v1857 = vmul.f32 1.0, %v1856
    %v1858 = vrcp.pop %v1839
    %v1859 = vmul.f32 1.0, %v1858
    %v1860 = vrcp.pop %v1840
    %v1861 = vmul.f32 1.0, %v1860
    %v1862 = vrcp.pop %v1841
    %v1863 = vmul.f32 1.0, %v1862
    %v1864 = vrcp.pop %v1842
    %v1865 = vmul.f32 1.0, %v1864
    %v1866 = vrcp.pop %v1843
    %v1867 = vmul.f32 1.0, %v1866
    %v1868 = vrcp.pop %v1844
    %v1869 = vmul.f32 1.0, %v1868
    %v1870 = vrcp.pop %v1845
    %v1871 = vmul.f32 1.0, %v1870
    %v1872 = vrcp.pop %v1846
    %v1873 = vmul.f32 1.0, %v1872
    %v1874 = vrcp.pop %v1847
    %v1875 = vmul.f32 1.0, %v1874
    %v1876 = vrcp.pop %v1848
    %v1877 = vmul.f32 1.0, %v1876
    %v1878 = vrcp.pop %v1849
    %v1879 = vmul.f32 1.0, %v1878
    %v1880 = vrcp.pop %v1850
    %v1881 = vmul.f32 1.0, %v1880
    %v1882 = vrcp.pop %v1851
    %v1883 = vmul.f32 1.0, %v1882
    %v1884 = vsub.f32 %v45, %v173
    %v1885 = vsub.f32 %v46, %v175
    %v1886 = vsub.f32 %v47, %v262
    %v1887 = vsub.f32 %v48, %v264
    %v1888 = vsub.f32 %v49, %v179
    %v1889 = vsub.f32 %v50, %v181
    %v1890 = vsub.f32 %v51, %v268
    %v1891 = vsub.f32 %v52, %v270
    %v1892 = vsub.f32 %v53, %v185
    %v1893 = vsub.f32 %v54, %v187
    %v1894 = vsub.f32 %v55, %v274
    %v1895 = vsub.f32 %v56, %v276
    %v1896 = vsub.f32 %v57, %v191
    %v1897 = vsub.f32 %v58, %v193
    %v1898 = vsub.f32 %v59, %v280
    %v1899 = vsub.f32 %v60, %v282
    %v1900 = vmul.f32 %v1853, %v1884
    %v1901 = vmul.f32 %v1855, %v1885
    %v1902 = vmul.f32 %v1857, %v1886
    %v1903 = vmul.f32 %v1859, %v1887
    %v1904 = vmul.f32 %v1861, %v1888
    %v1905 = vmul.f32 %v1863, %v1889
    %v1906 = vmul.f32 %v1865, %v1890
    %v1907 = vmul.f32 %v1867, %v1891
    %v1908 = vmul.f32 %v1869, %v1892
    %v1909 = vmul.f32 %v1871, %v1893
    %v1910 = vmul.f32 %v1873, %v1894
    %v1911 = vmul.f32 %v1875, %v1895
    %v1912 = vmul.f32 %v1877, %v1896
    %v1913 = vmul.f32 %v1879, %v1897
    %v1914 = vmul.f32 %v1881, %v1898
    %v1915 = vmul.f32 %v1883, %v1899
    %v1916 = vadd.f32 %v173, %v1900
    %v1917 = vadd.f32 %v175, %v1901
    %v1918 = vadd.f32 %v262, %v1902
    %v1919 = vadd.f32 %v264, %v1903
    %v1920 = vadd.f32 %v179, %v1904
    %v1921 = vadd.f32 %v181, %v1905
    %v1922 = vadd.f32 %v268, %v1906
    %v1923 = vadd.f32 %v270, %v1907
    %v1924 = vadd.f32 %v185, %v1908
    %v1925 = vadd.f32 %v187, %v1909
    %v1926 = vadd.f32 %v274, %v1910
    %v1927 = vadd.f32 %v276, %v1911
    %v1928 = vadd.f32 %v191, %v1912
    %v1929 = vadd.f32 %v193, %v1913
    %v1930 = vadd.f32 %v280, %v1914
    %v1931 = vadd.f32 %v282, %v1915
    %v1932 = vmul.f32 %v1916, 2.0
    %v1933 = vmul.f32 %v1917, 2.0
    %v1934 = vmul.f32 %v1918, 2.0
    %v1935 = vmul.f32 %v1919, 2.0
    %v1936 = vmul.f32 %v1920, 2.0
    %v1937 = vmul.f32 %v1921, 2.0
    %v1938 = vmul.f32 %v1922, 2.0
    %v1939 = vmul.f32 %v1923, 2.0
    %v1940 = vmul.f32 %v1924, 2.0
    %v1941 = vmul.f32 %v1925, 2.0
    %v1942 = vmul.f32 %v1926, 2.0
    %v1943 = vmul.f32 %v1927, 2.0
    %v1944 = vmul.f32 %v1928, 2.0
    %v1945 = vmul.f32 %v1929, 2.0
    %v1946 = vmul.f32 %v1930, 2.0
    %v1947 = vmul.f32 %v1931, 2.0
    %1948 = vst [vmem:[#allocation2] sm:$0xff] %v1932
    %1949 = vst [vmem:[#allocation2 + $0x8] sm:$0xff] %v1933
    %1950 = vst [vmem:[#allocation2 + $0x10] sm:$0xff] %v1934
    %1951 = vst [vmem:[#allocation2 + $0x18] sm:$0xff] %v1935
    %1952 = vst [vmem:[#allocation2 + $0x20] sm:$0xff] %v1936
    %1953 = vst [vmem:[#allocation2 + $0x28] sm:$0xff] %v1937
    %1954 = vst [vmem:[#allocation2 + $0x30] sm:$0xff] %v1938
    %1955 = vst [vmem:[#allocation2 + $0x38] sm:$0xff] %v1939
    %1956 = vst [vmem:[#allocation2 + $0x40] sm:$0xff] %v1940
    %1957 = vst [vmem:[#allocation2 + $0x48] sm:$0xff] %v1941
    %1958 = vst [vmem:[#allocation2 + $0x50] sm:$0xff] %v1942
    %1959 = vst [vmem:[#allocation2 + $0x58] sm:$0xff] %v1943
    %1960 = vst [vmem:[#allocation2 + $0x60] sm:$0xff] %v1944
    %1961 = vst [vmem:[#allocation2 + $0x68] sm:$0xff] %v1945
    %1962 = vst [vmem:[#allocation2 + $0x70] sm:$0xff] %v1946
    %1963 = vst [vmem:[#allocation2 + $0x78] sm:$0xff] %v1947
    // Predicated region
    $region54: #{tpu_custom_call.1} parent=1 // pred_check
      _
    $region55: #{tpu_custom_call.1} parent=1 // pred_check_branch
      %1965 = sbr.rel (0) target = $region57
    $region56: #{tpu_custom_call.1} parent=1 // pred_region
      %s1967 = ssub.s32 2048, 2048
      %1968 = vsyncadd [#allocation3], %s1967
      %s1969 = sshll.u32 [#allocation2], 4
      %s1970 = int_to_ptr.vmem [resolvable:$true] %s1969
      %1975 = dma.vmem_to_hbm [thread:$0]  %s1970, 2048, %s13, [#allocation3], 512, 512, 32
    $region57: #{tpu_custom_call.1} parent=1 // pred_fallthru
      _
    // Predicated region
    $region58: #{tpu_custom_call.1} parent=1 // pred_check
      _
    $region59: #{tpu_custom_call.1} parent=1 // pred_check_branch
      %1977 = sbr.rel (0) target = $region61
    $region60: #{tpu_custom_call.1} parent=1 // pred_region
      %1978 = dma.done [#allocation3], 2048
    $region61: #{tpu_custom_call.1} parent=1 // pred_fallthru
      _
    %1979 = vsyncpa [#allocation3], 1

</llo_original>
